<compile_context>
chip_gen: v5e
topology: v5e:2x2
jax: 0.10.0
libtpu: 0.0.40
codegen_flags: <defaults>
</compile_context>

<pallas_src>
import functools

import jax
import jax.numpy as jnp
from jax.experimental import pallas as pl
from jax.experimental.pallas import tpu as pltpu

EPS = 1e-5


# -----------------------------------------------------------------------------
# Fused trunk kernel: 3 -> 64 -> 128 -> 1024 -> running max over points.
# Grid: (B, num_point_tiles).  One grid step processes `tm` points of one batch.
# BN scale is pre-folded into the weights; only the per-channel shift is applied
# in-kernel.
# -----------------------------------------------------------------------------
def _trunk_kernel(x_ref, w1_ref, w2_ref, w3_ref,
                  b1_ref, b2_ref, b3_ref,
                  *out_refs, relu3, emit_pointfeat):
    gmax_ref = out_refs[0]
    pf_ref = out_refs[1] if emit_pointfeat else None
    n = pl.program_id(1)

    x = x_ref[...]                       # (tm, 3)  f32
    w1 = w1_ref[...]                     # (3, 64)  f32 (per-batch for the feat trunk)

    # Layer 1 (Cin=3): VPU broadcast-MAC -- avoids K-padding and MXU waste.
    h1 = (x[:, 0:1] * w1[0:1, :]
          + x[:, 1:2] * w1[1:2, :]
          + x[:, 2:3] * w1[2:3, :])
    h1 = jnp.maximum(h1 + b1_ref[...], 0.0)                        # (tm, 64) f32

    if emit_pointfeat:
        # Only used on the global_feat=False path (secondary output).
        pf_ref[...] = h1

    # Layer 2 (64 -> 128): MXU, bf16 operands, f32 accumulation.
    h2 = jnp.dot(h1.astype(jnp.bfloat16), w2_ref[...],
                 preferred_element_type=jnp.float32)
    h2 = jnp.maximum(h2 + b2_ref[...], 0.0)                        # (tm, 128) f32

    # Layer 3 (128 -> 1024): MXU, bf16 operands, f32 accumulation.
    h3 = jnp.dot(h2.astype(jnp.bfloat16), w3_ref[...],
                 preferred_element_type=jnp.float32)
    h3 = h3 + b3_ref[...]                                          # (tm, 1024) f32
    if relu3:
        h3 = jnp.maximum(h3, 0.0)

    tile_max = jnp.max(h3, axis=0, keepdims=True)                  # (1, 1024)

    # Output-resident running max across the point-tile (reduction) axis.
    @pl.when(n == 0)
    def _():
        gmax_ref[...] = tile_max

    @pl.when(n > 0)
    def _():
        gmax_ref[...] = jnp.maximum(gmax_ref[...], tile_max)


def fused_trunk(x_bn3, w1, w2, w3, sb1, sb2, sb3, *, relu3,
                emit_pointfeat=False, tm=512):
    """x_bn3: (B, N, 3) f32.  w1: (1 or B, 3, 64).  Returns (B, 1024) [, (B, N, 64)]."""
    B, N, _ = x_bn3.shape

    # Point-tile size: <=512 rows, multiple of 8 (sublanes).  Keeps per-step VMEM
    # to a few MB -> fits v7x's 64 MiB VMEM and double-buffers cleanly.
    tm = min(tm, N)
    tm = ((tm + 7) // 8) * 8
    n_tiles = -(-N // tm)
    Np = n_tiles * tm
    if Np != N:
        # Pad by replicating the last point: exact for the max reduction.
        pad = jnp.broadcast_to(x_bn3[:, N - 1:N, :], (B, Np - N, 3))
        x_bn3 = jnp.concatenate([x_bn3, pad], axis=1)

    s1, b1 = (jnp.asarray(v, jnp.float32) for v in sb1)
    s2, b2 = (jnp.asarray(v, jnp.float32) for v in sb2)
    s3, b3 = (jnp.asarray(v, jnp.float32) for v in sb3)

    # Fold BN scale into the weights (f32 fold, then bf16 cast for the MXU layers).
    w1 = (w1.astype(jnp.float32) * s1.reshape(1, 1, -1))
    w2 = (w2.astype(jnp.float32) * s2.reshape(1, -1)).astype(jnp.bfloat16)
    w3 = (w3.astype(jnp.float32) * s3.reshape(1, -1)).astype(jnp.bfloat16)
    b1 = b1.reshape(1, -1)
    b2 = b2.reshape(1, -1)
    b3 = b3.reshape(1, -1)

    per_batch_w1 = (w1.shape[0] == B)
    w1_idx = (lambda b, n: (b, 0, 0)) if per_batch_w1 else (lambda b, n: (0, 0, 0))

    out_shapes = [jax.ShapeDtypeStruct((B, 1, 1024), jnp.float32)]
    out_specs = [pl.BlockSpec((None, 1, 1024), lambda b, n: (b, 0, 0))]
    if emit_pointfeat:
        out_shapes.append(jax.ShapeDtypeStruct((B, Np, 64), jnp.float32))
        out_specs.append(pl.BlockSpec((None, tm, 64), lambda b, n: (b, n, 0)))

    kernel = functools.partial(_trunk_kernel, relu3=relu3,
                               emit_pointfeat=emit_pointfeat)
    outs = pl.pallas_call(
        kernel,
        out_shape=tuple(out_shapes) if emit_pointfeat else out_shapes[0],
        grid_spec=pltpu.PrefetchScalarGridSpec(
            num_scalar_prefetch=0,
            grid=(B, n_tiles),
            in_specs=[
                pl.BlockSpec((None, tm, 3), lambda b, n: (b, n, 0)),   # x tile
                pl.BlockSpec((None, 3, 64), w1_idx),                   # W1 (folded)
                pl.BlockSpec((64, 128), lambda b, n: (0, 0)),          # W2 (bf16)
                pl.BlockSpec((128, 1024), lambda b, n: (0, 0)),        # W3 (bf16)
                pl.BlockSpec((1, 64), lambda b, n: (0, 0)),            # shift 1
                pl.BlockSpec((1, 128), lambda b, n: (0, 0)),           # shift 2
                pl.BlockSpec((1, 1024), lambda b, n: (0, 0)),          # shift 3
            ],
            out_specs=out_specs if emit_pointfeat else out_specs[0],
        ),
        compiler_params=pltpu.CompilerParams(
            dimension_semantics=("parallel", "arbitrary")),
    )(x_bn3, w1, w2, w3, b1, b2, b3)

    if emit_pointfeat:
        gmax, pf = outs
        return gmax.reshape(B, 1024), pf[:, :N, :]
    return outs.reshape(B, 1024)


# -----------------------------------------------------------------------------
# Parameters (deterministic, in-script; BN in eval mode with PyTorch-default
# running stats, folded with the conv/linear bias into per-channel scale/shift).
# -----------------------------------------------------------------------------
def init_params(key):
    keys = jax.random.split(key, 20)
    it = iter(keys)

    def dense(cin, cout):
        w = jax.random.normal(next(it), (cin, cout), jnp.float32) / jnp.sqrt(cin)
        b = jax.random.normal(next(it), (cout,), jnp.float32) * 0.02
        return w, b

    def bn_fold(bias, cout):
        gamma = jnp.ones((cout,), jnp.float32)
        beta = jnp.zeros((cout,), jnp.float32)
        mean = jnp.zeros((cout,), jnp.float32)
        var = jnp.ones((cout,), jnp.float32)
        scale = gamma / jnp.sqrt(var + EPS)
        shift = beta + (bias - mean) * scale
        return scale, shift

    p = {}
    # STN3d
    w, b = dense(3, 64);     p["stn_w1"] = w;     p["stn_sb1"] = bn_fold(b, 64)
    w, b = dense(64, 128);   p["stn_w2"] = w;     p["stn_sb2"] = bn_fold(b, 128)
    w, b = dense(128, 1024); p["stn_w3"] = w;     p["stn_sb3"] = bn_fold(b, 1024)
    w, b = dense(1024, 512); p["stn_fc1_w"] = w;  p["stn_sb4"] = bn_fold(b, 512)
    w, b = dense(512, 256);  p["stn_fc2_w"] = w;  p["stn_sb5"] = bn_fold(b, 256)
    w, b = dense(256, 9);    p["stn_fc3_w"] = w;  p["stn_fc3_b"] = b
    # PointNetfeat trunk
    w, b = dense(3, 64);     p["feat_w1"] = w;    p["feat_sb1"] = bn_fold(b, 64)
    w, b = dense(64, 128);   p["feat_w2"] = w;    p["feat_sb2"] = bn_fold(b, 128)
    w, b = dense(128, 1024); p["feat_w3"] = w;    p["feat_sb3"] = bn_fold(b, 1024)
    return p


# -----------------------------------------------------------------------------
# Small shared helper (tiny FC head + reference): x @ (w*scale) + shift [+ ReLU]
# (same scale-fold-into-weights policy as the kernel, exact in real arithmetic)
# -----------------------------------------------------------------------------
def _dense_bn(x, w, scale, shift, relu, mxu_bf16=False):
    ws = w * scale[None, :]
    if mxu_bf16:
        y = jnp.dot(x.astype(jnp.bfloat16), ws.astype(jnp.bfloat16),
                    preferred_element_type=jnp.float32)
    else:
        y = jnp.dot(x, ws, precision=jax.lax.Precision.HIGHEST)
    y = y + shift[None, :]
    return jnp.maximum(y, 0.0) if relu else y


# -----------------------------------------------------------------------------
# Forward passes
# -----------------------------------------------------------------------------
def stn3d_forward(params, xt):
    """xt: (B, N, 3) channels-last points -> (B, 3, 3) transform."""
    B = xt.shape[0]
    g = fused_trunk(xt, params["stn_w1"][None], params["stn_w2"], params["stn_w3"],
                    params["stn_sb1"], params["stn_sb2"], params["stn_sb3"],
                    relu3=True, emit_pointfeat=False)                 # (B, 1024)
    # FC head (M = B rows): plain JAX -- a Pallas launch here is pure overhead.
    h = _dense_bn(g, params["stn_fc1_w"], *params["stn_sb4"], relu=True)
    h = _dense_bn(h, params["stn_fc2_w"], *params["stn_sb5"], relu=True)
    h = jnp.dot(h, params["stn_fc3_w"],
                precision=jax.lax.Precision.HIGHEST) + params["stn_fc3_b"]
    iden = jnp.eye(3, dtype=jnp.float32).reshape(1, 9)
    return (h + iden).reshape(B, 3, 3)


def pointnetfeat_forward(params, x_bcn, global_feat=True):
    B, C, N = x_bcn.shape
    xt = jnp.transpose(x_bcn, (0, 2, 1))                              # (B, N, 3)
    trans = stn3d_forward(params, xt)
    # Fold torch.bmm(x, trans) into conv1:  (x @ trans) @ W1 == x @ (trans @ W1)
    w1_b = jnp.einsum("bij,jk->bik", trans, params["feat_w1"],
                      precision=jax.lax.Precision.HIGHEST)            # (B, 3, 64)
    if global_feat:
        g = fused_trunk(xt, w1_b, params["feat_w2"], params["feat_w3"],
                        params["feat_sb1"], params["feat_sb2"], params["feat_sb3"],
                        relu3=False, emit_pointfeat=False)            # (B, 1024)
        return g, trans
    g, pf = fused_trunk(xt, w1_b, params["feat_w2"], params["feat_w3"],
                        params["feat_sb1"], params["feat_sb2"], params["feat_sb3"],
                        relu3=False, emit_pointfeat=True)
    pointfeat = jnp.transpose(pf, (0, 2, 1))                          # (B, 64, N)
    gexp = jnp.broadcast_to(g[:, :, None], (B, 1024, N))
    return jnp.concatenate([gexp, pointfeat], axis=1), trans


# -----------------------------------------------------------------------------
# Pure-JAX reference (PyTorch op order; mirrors the kernel's scale-folded,
# bf16-operand / f32-accumulate policy on the two MXU layers) for correctness.
# -----------------------------------------------------------------------------
def ref_forward(params, x, global_feat=True):
    B, C, N = x.shape
    xt = jnp.transpose(x, (0, 2, 1)).reshape(B * N, C)
    h = _dense_bn(xt, params["stn_w1"], *params["stn_sb1"], relu=True)
    h = _dense_bn(h, params["stn_w2"], *params["stn_sb2"], relu=True, mxu_bf16=True)
    h = _dense_bn(h, params["stn_w3"], *params["stn_sb3"], relu=True, mxu_bf16=True)
    g = jnp.max(h.reshape(B, N, 1024), axis=1)
    g = _dense_bn(g, params["stn_fc1_w"], *params["stn_sb4"], relu=True)
    g = _dense_bn(g, params["stn_fc2_w"], *params["stn_sb5"], relu=True)
    g = jnp.dot(g, params["stn_fc3_w"],
                precision=jax.lax.Precision.HIGHEST) + params["stn_fc3_b"]
    trans = (g + jnp.eye(3, dtype=jnp.float32).reshape(1, 9)).reshape(B, 3, 3)

    xt3 = jnp.einsum("bnc,bcd->bnd", jnp.transpose(x, (0, 2, 1)), trans,
                     precision=jax.lax.Precision.HIGHEST)
    h = xt3.reshape(B * N, 3)
    h1 = _dense_bn(h, params["feat_w1"], *params["feat_sb1"], relu=True)
    h2 = _dense_bn(h1, params["feat_w2"], *params["feat_sb2"], relu=True, mxu_bf16=True)
    h3 = _dense_bn(h2, params["feat_w3"], *params["feat_sb3"], relu=False, mxu_bf16=True)
    g = jnp.max(h3.reshape(B, N, 1024), axis=1)
    if global_feat:
        return g, trans
    pointfeat = jnp.transpose(h1.reshape(B, N, 64), (0, 2, 1))
    gexp = jnp.broadcast_to(g[:, :, None], (B, 1024, N))
    return jnp.concatenate([gexp, pointfeat], axis=1), trans


if __name__ == "__main__":
    B, N = 2, 16                                   # small shapes: batch=2, points=16
    key = jax.random.PRNGKey(0)
    pkey, xkey = jax.random.split(key)
    params = init_params(pkey)
    x = jax.random.normal(xkey, (B, 3, N), jnp.float32)

    # global_feat=True path
    fwd = jax.jit(functools.partial(pointnetfeat_forward, global_feat=True))
    feat, trans = fwd(params, x)
    jax.block_until_ready((feat, trans))

    feat_ref, trans_ref = ref_forward(params, x, global_feat=True)
    assert feat.shape == (B, 1024) and trans.shape == (B, 3, 3)
    assert jnp.allclose(trans, trans_ref, rtol=1e-2, atol=1e-2)
    assert jnp.allclose(feat, feat_ref, rtol=1e-2, atol=1e-2)

    # global_feat=False path (concat of global + per-point features)
    fwd_full = jax.jit(functools.partial(pointnetfeat_forward, global_feat=False))
    full, trans2 = fwd_full(params, x)
    jax.block_until_ready((full, trans2))
    full_ref, _ = ref_forward(params, x, global_feat=False)
    assert full.shape == (B, 1024 + 64, N)
    assert jnp.allclose(full, full_ref, rtol=1e-2, atol=1e-2)

    print("KERNEL_OK")
</pallas_src>

<mosaic_0001>
module attributes {stable_mosaic.version = 11 : i64} {
  func.func @_trunk_kernel(%arg0: i32, %arg1: i32, %arg2: memref<1x16x3xf32, #tpu.memory_space<vmem>>, %arg3: memref<1x3x64xf32, #tpu.memory_space<vmem>>, %arg4: memref<64x128xbf16, #tpu.memory_space<vmem>>, %arg5: memref<128x1024xbf16, #tpu.memory_space<vmem>>, %arg6: memref<1x64xf32, #tpu.memory_space<vmem>>, %arg7: memref<1x128xf32, #tpu.memory_space<vmem>>, %arg8: memref<1x1024xf32, #tpu.memory_space<vmem>>, %arg9: memref<1x1x1024xf32, #tpu.memory_space<vmem>>) attributes {dimension_semantics = [#tpu.dimension_semantics<parallel>, #tpu.dimension_semantics<arbitrary>], iteration_bounds = array<i64: 2, 1>, scalar_prefetch = 0 : i64, scratch_operands = 0 : i64, tpu.core_type = #tpu.core_type<tc>, window_params = [{transform_indices = @transform_0, window_bounds = array<i64: 1, 16, 3>}, {pipeline_mode = #tpu.pipeline_mode<synchronous>, transform_indices = @transform_1, window_bounds = array<i64: 1, 3, 64>}, {pipeline_mode = #tpu.pipeline_mode<synchronous>, transform_indices = @transform_2, window_bounds = array<i64: 64, 128>}, {pipeline_mode = #tpu.pipeline_mode<synchronous>, transform_indices = @transform_3, window_bounds = array<i64: 128, 1024>}, {pipeline_mode = #tpu.pipeline_mode<synchronous>, transform_indices = @transform_4, window_bounds = array<i64: 1, 64>}, {pipeline_mode = #tpu.pipeline_mode<synchronous>, transform_indices = @transform_5, window_bounds = array<i64: 1, 128>}, {pipeline_mode = #tpu.pipeline_mode<synchronous>, transform_indices = @transform_6, window_bounds = array<i64: 1, 1024>}, {transform_indices = @transform_7, window_bounds = array<i64: 1, 1, 1024>}]} {
    %c0 = arith.constant 0 : index
    %c0_0 = arith.constant 0 : index
    %c0_1 = arith.constant 0 : index
    %0 = vector.load %arg2[%c0, %c0_0, %c0_1] : memref<1x16x3xf32, #tpu.memory_space<vmem>>, vector<1x16x3xf32>
    %1 = vector.shape_cast %0 : vector<1x16x3xf32> to vector<16x3xf32>
    %c0_2 = arith.constant 0 : index
    %c0_3 = arith.constant 0 : index
    %c0_4 = arith.constant 0 : index
    %2 = vector.load %arg3[%c0_2, %c0_3, %c0_4] : memref<1x3x64xf32, #tpu.memory_space<vmem>>, vector<1x3x64xf32>
    %3 = vector.shape_cast %2 : vector<1x3x64xf32> to vector<3x64xf32>
    %4 = vector.extract_strided_slice %1 {offsets = [0, 0], sizes = [16, 1], strides = [1, 1]} : vector<16x3xf32> to vector<16x1xf32>
    %5 = vector.extract_strided_slice %3 {offsets = [0, 0], sizes = [1, 64], strides = [1, 1]} : vector<3x64xf32> to vector<1x64xf32>
    %6 = vector.broadcast %4 : vector<16x1xf32> to vector<16x64xf32>
    %7 = vector.broadcast %5 : vector<1x64xf32> to vector<16x64xf32>
    %8 = arith.mulf %6, %7 : vector<16x64xf32>
    %9 = vector.extract_strided_slice %1 {offsets = [0, 1], sizes = [16, 1], strides = [1, 1]} : vector<16x3xf32> to vector<16x1xf32>
    %10 = vector.extract_strided_slice %3 {offsets = [1, 0], sizes = [1, 64], strides = [1, 1]} : vector<3x64xf32> to vector<1x64xf32>
    %11 = vector.broadcast %9 : vector<16x1xf32> to vector<16x64xf32>
    %12 = vector.broadcast %10 : vector<1x64xf32> to vector<16x64xf32>
    %13 = arith.mulf %11, %12 : vector<16x64xf32>
    %14 = arith.addf %8, %13 : vector<16x64xf32>
    %15 = vector.extract_strided_slice %1 {offsets = [0, 2], sizes = [16, 1], strides = [1, 1]} : vector<16x3xf32> to vector<16x1xf32>
    %16 = vector.extract_strided_slice %3 {offsets = [2, 0], sizes = [1, 64], strides = [1, 1]} : vector<3x64xf32> to vector<1x64xf32>
    %17 = vector.broadcast %15 : vector<16x1xf32> to vector<16x64xf32>
    %18 = vector.broadcast %16 : vector<1x64xf32> to vector<16x64xf32>
    %19 = arith.mulf %17, %18 : vector<16x64xf32>
    %20 = arith.addf %14, %19 : vector<16x64xf32>
    %c0_5 = arith.constant 0 : index
    %c0_6 = arith.constant 0 : index
    %21 = vector.load %arg6[%c0_5, %c0_6] : memref<1x64xf32, #tpu.memory_space<vmem>>, vector<1x64xf32>
    %22 = vector.broadcast %21 : vector<1x64xf32> to vector<16x64xf32>
    %23 = arith.addf %20, %22 : vector<16x64xf32>
    %cst = arith.constant 0.000000e+00 : f32
    %24 = vector.broadcast %cst : f32 to vector<16x64xf32>
    %25 = arith.maximumf %23, %24 : vector<16x64xf32>
    %26 = arith.truncf %25 : vector<16x64xf32> to vector<16x64xbf16>
    %c0_7 = arith.constant 0 : index
    %c0_8 = arith.constant 0 : index
    %27 = vector.load %arg4[%c0_7, %c0_8] : memref<64x128xbf16, #tpu.memory_space<vmem>>, vector<64x128xbf16>
    %cst_9 = arith.constant dense<0.000000e+00> : vector<16x128xf32>
    %28 = tpu.matmul %26, %27, %cst_9 {dimension_numbers = #tpu.dot_dimension_numbers<[1], [0], [0], [1], [0, 0, 1, 1], [], []>} : vector<16x64xbf16>, vector<64x128xbf16>, vector<16x128xf32> -> vector<16x128xf32>
    %c0_10 = arith.constant 0 : index
    %c0_11 = arith.constant 0 : index
    %29 = vector.load %arg7[%c0_10, %c0_11] : memref<1x128xf32, #tpu.memory_space<vmem>>, vector<1x128xf32>
    %30 = vector.broadcast %29 : vector<1x128xf32> to vector<16x128xf32>
    %31 = arith.addf %28, %30 : vector<16x128xf32>
    %cst_12 = arith.constant 0.000000e+00 : f32
    %32 = vector.broadcast %cst_12 : f32 to vector<16x128xf32>
    %33 = arith.maximumf %31, %32 : vector<16x128xf32>
    %34 = arith.truncf %33 : vector<16x128xf32> to vector<16x128xbf16>
    %c0_13 = arith.constant 0 : index
    %c0_14 = arith.constant 0 : index
    %35 = vector.load %arg5[%c0_13, %c0_14] : memref<128x1024xbf16, #tpu.memory_space<vmem>>, vector<128x1024xbf16>
    %cst_15 = arith.constant dense<0.000000e+00> : vector<16x1024xf32>
    %36 = tpu.matmul %34, %35, %cst_15 {dimension_numbers = #tpu.dot_dimension_numbers<[1], [0], [0], [1], [0, 0, 1, 1], [], []>} : vector<16x128xbf16>, vector<128x1024xbf16>, vector<16x1024xf32> -> vector<16x1024xf32>
    %c0_16 = arith.constant 0 : index
    %c0_17 = arith.constant 0 : index
    %37 = vector.load %arg8[%c0_16, %c0_17] : memref<1x1024xf32, #tpu.memory_space<vmem>>, vector<1x1024xf32>
    %38 = vector.broadcast %37 : vector<1x1024xf32> to vector<16x1024xf32>
    %39 = arith.addf %36, %38 : vector<16x1024xf32>
    %cst_18 = arith.constant 0.000000e+00 : f32
    %40 = vector.broadcast %cst_18 : f32 to vector<16x1024xf32>
    %41 = arith.maximumf %39, %40 : vector<16x1024xf32>
    %cst_19 = arith.constant dense<0xFF800000> : vector<1024xf32>
    %42 = vector.multi_reduction <maximumf>, %41, %cst_19 [0] : vector<16x1024xf32> to vector<1024xf32>
    %43 = vector.shape_cast %42 : vector<1024xf32> to vector<1x1024xf32>
    %c0_i32 = arith.constant 0 : i32
    %44 = arith.cmpi eq, %arg1, %c0_i32 : i32
    %45 = arith.extui %44 : i1 to i32
    %c0_i32_20 = arith.constant 0 : i32
    %46 = arith.cmpi ne, %45, %c0_i32_20 : i32
    scf.if %46 {
      %c0_23 = arith.constant 0 : index
      %c0_24 = arith.constant 0 : index
      %c0_25 = arith.constant 0 : index
      %50 = vector.load %arg9[%c0_23, %c0_24, %c0_25] : memref<1x1x1024xf32, #tpu.memory_space<vmem>>, vector<1x1x1024xf32>
      %51 = vector.shape_cast %50 : vector<1x1x1024xf32> to vector<1x1024xf32>
      %52 = vector.shape_cast %43 : vector<1x1024xf32> to vector<1x1x1024xf32>
      tpu.vector_store %arg9[%c0_23, %c0_24, %c0_25], %52 {strides = array<i32>} : memref<1x1x1024xf32, #tpu.memory_space<vmem>>, vector<1x1x1024xf32>,
    } else {
    }
    %c0_i32_21 = arith.constant 0 : i32
    %47 = arith.cmpi sgt, %arg1, %c0_i32_21 : i32
    %48 = arith.extui %47 : i1 to i32
    %c0_i32_22 = arith.constant 0 : i32
    %49 = arith.cmpi ne, %48, %c0_i32_22 : i32
    scf.if %49 {
      %c0_23 = arith.constant 0 : index
      %c0_24 = arith.constant 0 : index
      %c0_25 = arith.constant 0 : index
      %50 = vector.load %arg9[%c0_23, %c0_24, %c0_25] : memref<1x1x1024xf32, #tpu.memory_space<vmem>>, vector<1x1x1024xf32>
      %51 = vector.shape_cast %50 : vector<1x1x1024xf32> to vector<1x1024xf32>
      %52 = arith.maximumf %51, %43 : vector<1x1024xf32>
      %c0_26 = arith.constant 0 : index
      %c0_27 = arith.constant 0 : index
      %c0_28 = arith.constant 0 : index
      %53 = vector.load %arg9[%c0_26, %c0_27, %c0_28] : memref<1x1x1024xf32, #tpu.memory_space<vmem>>, vector<1x1x1024xf32>
      %54 = vector.shape_cast %53 : vector<1x1x1024xf32> to vector<1x1024xf32>
      %55 = vector.shape_cast %52 : vector<1x1024xf32> to vector<1x1x1024xf32>
      tpu.vector_store %arg9[%c0_26, %c0_27, %c0_28], %55 {strides = array<i32>} : memref<1x1x1024xf32, #tpu.memory_space<vmem>>, vector<1x1x1024xf32>,
    } else {
    }
    return
  }
  func.func @transform_0(%arg0: i32, %arg1: i32) -> (i32, i32, i32) {
    %c0_i32 = arith.constant 0 : i32
    %c0_i32_0 = arith.constant 0 : i32
    return %arg0, %arg1, %c0_i32 : i32, i32, i32
  }
  func.func @transform_1(%arg0: i32, %arg1: i32) -> (i32, i32, i32) {
    %c0_i32 = arith.constant 0 : i32
    %c0_i32_0 = arith.constant 0 : i32
    %c0_i32_1 = arith.constant 0 : i32
    %c0_i32_2 = arith.constant 0 : i32
    return %c0_i32, %c0_i32_0, %c0_i32_1 : i32, i32, i32
  }
  func.func @transform_2(%arg0: i32, %arg1: i32) -> (i32, i32) {
    %c0_i32 = arith.constant 0 : i32
    %c0_i32_0 = arith.constant 0 : i32
    %c0_i32_1 = arith.constant 0 : i32
    return %c0_i32, %c0_i32_0 : i32, i32
  }
  func.func @transform_3(%arg0: i32, %arg1: i32) -> (i32, i32) {
    %c0_i32 = arith.constant 0 : i32
    %c0_i32_0 = arith.constant 0 : i32
    %c0_i32_1 = arith.constant 0 : i32
    return %c0_i32, %c0_i32_0 : i32, i32
  }
  func.func @transform_4(%arg0: i32, %arg1: i32) -> (i32, i32) {
    %c0_i32 = arith.constant 0 : i32
    %c0_i32_0 = arith.constant 0 : i32
    %c0_i32_1 = arith.constant 0 : i32
    return %c0_i32, %c0_i32_0 : i32, i32
  }
  func.func @transform_5(%arg0: i32, %arg1: i32) -> (i32, i32) {
    %c0_i32 = arith.constant 0 : i32
    %c0_i32_0 = arith.constant 0 : i32
    %c0_i32_1 = arith.constant 0 : i32
    return %c0_i32, %c0_i32_0 : i32, i32
  }
  func.func @transform_6(%arg0: i32, %arg1: i32) -> (i32, i32) {
    %c0_i32 = arith.constant 0 : i32
    %c0_i32_0 = arith.constant 0 : i32
    %c0_i32_1 = arith.constant 0 : i32
    return %c0_i32, %c0_i32_0 : i32, i32
  }
  func.func @transform_7(%arg0: i32, %arg1: i32) -> (i32, i32, i32) {
    %c0_i32 = arith.constant 0 : i32
    %c0_i32_0 = arith.constant 0 : i32
    %c0_i32_1 = arith.constant 0 : i32
    return %arg0, %c0_i32, %c0_i32_0 : i32, i32, i32
  }
}

module attributes {stable_mosaic.version = 11 : i64} {
  func.func @_trunk_kernel(%arg0: i32, %arg1: i32, %arg2: memref<1x16x3xf32, #tpu.memory_space<vmem>>, %arg3: memref<1x3x64xf32, #tpu.memory_space<vmem>>, %arg4: memref<64x128xbf16, #tpu.memory_space<vmem>>, %arg5: memref<128x1024xbf16, #tpu.memory_space<vmem>>, %arg6: memref<1x64xf32, #tpu.memory_space<vmem>>, %arg7: memref<1x128xf32, #tpu.memory_space<vmem>>, %arg8: memref<1x1024xf32, #tpu.memory_space<vmem>>, %arg9: memref<1x1x1024xf32, #tpu.memory_space<vmem>>) attributes {dimension_semantics = [#tpu.dimension_semantics<parallel>, #tpu.dimension_semantics<arbitrary>], iteration_bounds = array<i64: 2, 1>, scalar_prefetch = 0 : i64, scratch_operands = 0 : i64, tpu.core_type = #tpu.core_type<tc>, window_params = [{transform_indices = @transform_0, window_bounds = array<i64: 1, 16, 3>}, {transform_indices = @transform_1, window_bounds = array<i64: 1, 3, 64>}, {pipeline_mode = #tpu.pipeline_mode<synchronous>, transform_indices = @transform_2, window_bounds = array<i64: 64, 128>}, {pipeline_mode = #tpu.pipeline_mode<synchronous>, transform_indices = @transform_3, window_bounds = array<i64: 128, 1024>}, {pipeline_mode = #tpu.pipeline_mode<synchronous>, transform_indices = @transform_4, window_bounds = array<i64: 1, 64>}, {pipeline_mode = #tpu.pipeline_mode<synchronous>, transform_indices = @transform_5, window_bounds = array<i64: 1, 128>}, {pipeline_mode = #tpu.pipeline_mode<synchronous>, transform_indices = @transform_6, window_bounds = array<i64: 1, 1024>}, {transform_indices = @transform_7, window_bounds = array<i64: 1, 1, 1024>}]} {
    %c0 = arith.constant 0 : index
    %c0_0 = arith.constant 0 : index
    %c0_1 = arith.constant 0 : index
    %0 = vector.load %arg2[%c0, %c0_0, %c0_1] : memref<1x16x3xf32, #tpu.memory_space<vmem>>, vector<1x16x3xf32>
    %1 = vector.shape_cast %0 : vector<1x16x3xf32> to vector<16x3xf32>
    %c0_2 = arith.constant 0 : index
    %c0_3 = arith.constant 0 : index
    %c0_4 = arith.constant 0 : index
    %2 = vector.load %arg3[%c0_2, %c0_3, %c0_4] : memref<1x3x64xf32, #tpu.memory_space<vmem>>, vector<1x3x64xf32>
    %3 = vector.shape_cast %2 : vector<1x3x64xf32> to vector<3x64xf32>
    %4 = vector.extract_strided_slice %1 {offsets = [0, 0], sizes = [16, 1], strides = [1, 1]} : vector<16x3xf32> to vector<16x1xf32>
    %5 = vector.extract_strided_slice %3 {offsets = [0, 0], sizes = [1, 64], strides = [1, 1]} : vector<3x64xf32> to vector<1x64xf32>
    %6 = vector.broadcast %4 : vector<16x1xf32> to vector<16x64xf32>
    %7 = vector.broadcast %5 : vector<1x64xf32> to vector<16x64xf32>
    %8 = arith.mulf %6, %7 : vector<16x64xf32>
    %9 = vector.extract_strided_slice %1 {offsets = [0, 1], sizes = [16, 1], strides = [1, 1]} : vector<16x3xf32> to vector<16x1xf32>
    %10 = vector.extract_strided_slice %3 {offsets = [1, 0], sizes = [1, 64], strides = [1, 1]} : vector<3x64xf32> to vector<1x64xf32>
    %11 = vector.broadcast %9 : vector<16x1xf32> to vector<16x64xf32>
    %12 = vector.broadcast %10 : vector<1x64xf32> to vector<16x64xf32>
    %13 = arith.mulf %11, %12 : vector<16x64xf32>
    %14 = arith.addf %8, %13 : vector<16x64xf32>
    %15 = vector.extract_strided_slice %1 {offsets = [0, 2], sizes = [16, 1], strides = [1, 1]} : vector<16x3xf32> to vector<16x1xf32>
    %16 = vector.extract_strided_slice %3 {offsets = [2, 0], sizes = [1, 64], strides = [1, 1]} : vector<3x64xf32> to vector<1x64xf32>
    %17 = vector.broadcast %15 : vector<16x1xf32> to vector<16x64xf32>
    %18 = vector.broadcast %16 : vector<1x64xf32> to vector<16x64xf32>
    %19 = arith.mulf %17, %18 : vector<16x64xf32>
    %20 = arith.addf %14, %19 : vector<16x64xf32>
    %c0_5 = arith.constant 0 : index
    %c0_6 = arith.constant 0 : index
    %21 = vector.load %arg6[%c0_5, %c0_6] : memref<1x64xf32, #tpu.memory_space<vmem>>, vector<1x64xf32>
    %22 = vector.broadcast %21 : vector<1x64xf32> to vector<16x64xf32>
    %23 = arith.addf %20, %22 : vector<16x64xf32>
    %cst = arith.constant 0.000000e+00 : f32
    %24 = vector.broadcast %cst : f32 to vector<16x64xf32>
    %25 = arith.maximumf %23, %24 : vector<16x64xf32>
    %26 = arith.truncf %25 : vector<16x64xf32> to vector<16x64xbf16>
    %c0_7 = arith.constant 0 : index
    %c0_8 = arith.constant 0 : index
    %27 = vector.load %arg4[%c0_7, %c0_8] : memref<64x128xbf16, #tpu.memory_space<vmem>>, vector<64x128xbf16>
    %cst_9 = arith.constant dense<0.000000e+00> : vector<16x128xf32>
    %28 = tpu.matmul %26, %27, %cst_9 {dimension_numbers = #tpu.dot_dimension_numbers<[1], [0], [0], [1], [0, 0, 1, 1], [], []>} : vector<16x64xbf16>, vector<64x128xbf16>, vector<16x128xf32> -> vector<16x128xf32>
    %c0_10 = arith.constant 0 : index
    %c0_11 = arith.constant 0 : index
    %29 = vector.load %arg7[%c0_10, %c0_11] : memref<1x128xf32, #tpu.memory_space<vmem>>, vector<1x128xf32>
    %30 = vector.broadcast %29 : vector<1x128xf32> to vector<16x128xf32>
    %31 = arith.addf %28, %30 : vector<16x128xf32>
    %cst_12 = arith.constant 0.000000e+00 : f32
    %32 = vector.broadcast %cst_12 : f32 to vector<16x128xf32>
    %33 = arith.maximumf %31, %32 : vector<16x128xf32>
    %34 = arith.truncf %33 : vector<16x128xf32> to vector<16x128xbf16>
    %c0_13 = arith.constant 0 : index
    %c0_14 = arith.constant 0 : index
    %35 = vector.load %arg5[%c0_13, %c0_14] : memref<128x1024xbf16, #tpu.memory_space<vmem>>, vector<128x1024xbf16>
    %cst_15 = arith.constant dense<0.000000e+00> : vector<16x1024xf32>
    %36 = tpu.matmul %34, %35, %cst_15 {dimension_numbers = #tpu.dot_dimension_numbers<[1], [0], [0], [1], [0, 0, 1, 1], [], []>} : vector<16x128xbf16>, vector<128x1024xbf16>, vector<16x1024xf32> -> vector<16x1024xf32>
    %c0_16 = arith.constant 0 : index
    %c0_17 = arith.constant 0 : index
    %37 = vector.load %arg8[%c0_16, %c0_17] : memref<1x1024xf32, #tpu.memory_space<vmem>>, vector<1x1024xf32>
    %38 = vector.broadcast %37 : vector<1x1024xf32> to vector<16x1024xf32>
    %39 = arith.addf %36, %38 : vector<16x1024xf32>
    %cst_18 = arith.constant dense<0xFF800000> : vector<1024xf32>
    %40 = vector.multi_reduction <maximumf>, %39, %cst_18 [0] : vector<16x1024xf32> to vector<1024xf32>
    %41 = vector.shape_cast %40 : vector<1024xf32> to vector<1x1024xf32>
    %c0_i32 = arith.constant 0 : i32
    %42 = arith.cmpi eq, %arg1, %c0_i32 : i32
    %43 = arith.extui %42 : i1 to i32
    %c0_i32_19 = arith.constant 0 : i32
    %44 = arith.cmpi ne, %43, %c0_i32_19 : i32
    scf.if %44 {
      %c0_22 = arith.constant 0 : index
      %c0_23 = arith.constant 0 : index
      %c0_24 = arith.constant 0 : index
      %48 = vector.load %arg9[%c0_22, %c0_23, %c0_24] : memref<1x1x1024xf32, #tpu.memory_space<vmem>>, vector<1x1x1024xf32>
      %49 = vector.shape_cast %48 : vector<1x1x1024xf32> to vector<1x1024xf32>
      %50 = vector.shape_cast %41 : vector<1x1024xf32> to vector<1x1x1024xf32>
      tpu.vector_store %arg9[%c0_22, %c0_23, %c0_24], %50 {strides = array<i32>} : memref<1x1x1024xf32, #tpu.memory_space<vmem>>, vector<1x1x1024xf32>,
    } else {
    }
    %c0_i32_20 = arith.constant 0 : i32
    %45 = arith.cmpi sgt, %arg1, %c0_i32_20 : i32
    %46 = arith.extui %45 : i1 to i32
    %c0_i32_21 = arith.constant 0 : i32
    %47 = arith.cmpi ne, %46, %c0_i32_21 : i32
    scf.if %47 {
      %c0_22 = arith.constant 0 : index
      %c0_23 = arith.constant 0 : index
      %c0_24 = arith.constant 0 : index
      %48 = vector.load %arg9[%c0_22, %c0_23, %c0_24] : memref<1x1x1024xf32, #tpu.memory_space<vmem>>, vector<1x1x1024xf32>
      %49 = vector.shape_cast %48 : vector<1x1x1024xf32> to vector<1x1024xf32>
      %50 = arith.maximumf %49, %41 : vector<1x1024xf32>
      %c0_25 = arith.constant 0 : index
      %c0_26 = arith.constant 0 : index
      %c0_27 = arith.constant 0 : index
      %51 = vector.load %arg9[%c0_25, %c0_26, %c0_27] : memref<1x1x1024xf32, #tpu.memory_space<vmem>>, vector<1x1x1024xf32>
      %52 = vector.shape_cast %51 : vector<1x1x1024xf32> to vector<1x1024xf32>
      %53 = vector.shape_cast %50 : vector<1x1024xf32> to vector<1x1x1024xf32>
      tpu.vector_store %arg9[%c0_25, %c0_26, %c0_27], %53 {strides = array<i32>} : memref<1x1x1024xf32, #tpu.memory_space<vmem>>, vector<1x1x1024xf32>,
    } else {
    }
    return
  }
  func.func @transform_0(%arg0: i32, %arg1: i32) -> (i32, i32, i32) {
    %c0_i32 = arith.constant 0 : i32
    %c0_i32_0 = arith.constant 0 : i32
    return %arg0, %arg1, %c0_i32 : i32, i32, i32
  }
  func.func @transform_1(%arg0: i32, %arg1: i32) -> (i32, i32, i32) {
    %c0_i32 = arith.constant 0 : i32
    %c0_i32_0 = arith.constant 0 : i32
    %c0_i32_1 = arith.constant 0 : i32
    return %arg0, %c0_i32, %c0_i32_0 : i32, i32, i32
  }
  func.func @transform_2(%arg0: i32, %arg1: i32) -> (i32, i32) {
    %c0_i32 = arith.constant 0 : i32
    %c0_i32_0 = arith.constant 0 : i32
    %c0_i32_1 = arith.constant 0 : i32
    return %c0_i32, %c0_i32_0 : i32, i32
  }
  func.func @transform_3(%arg0: i32, %arg1: i32) -> (i32, i32) {
    %c0_i32 = arith.constant 0 : i32
    %c0_i32_0 = arith.constant 0 : i32
    %c0_i32_1 = arith.constant 0 : i32
    return %c0_i32, %c0_i32_0 : i32, i32
  }
  func.func @transform_4(%arg0: i32, %arg1: i32) -> (i32, i32) {
    %c0_i32 = arith.constant 0 : i32
    %c0_i32_0 = arith.constant 0 : i32
    %c0_i32_1 = arith.constant 0 : i32
    return %c0_i32, %c0_i32_0 : i32, i32
  }
  func.func @transform_5(%arg0: i32, %arg1: i32) -> (i32, i32) {
    %c0_i32 = arith.constant 0 : i32
    %c0_i32_0 = arith.constant 0 : i32
    %c0_i32_1 = arith.constant 0 : i32
    return %c0_i32, %c0_i32_0 : i32, i32
  }
  func.func @transform_6(%arg0: i32, %arg1: i32) -> (i32, i32) {
    %c0_i32 = arith.constant 0 : i32
    %c0_i32_0 = arith.constant 0 : i32
    %c0_i32_1 = arith.constant 0 : i32
    return %c0_i32, %c0_i32_0 : i32, i32
  }
  func.func @transform_7(%arg0: i32, %arg1: i32) -> (i32, i32, i32) {
    %c0_i32 = arith.constant 0 : i32
    %c0_i32_0 = arith.constant 0 : i32
    %c0_i32_1 = arith.constant 0 : i32
    return %arg0, %c0_i32, %c0_i32_0 : i32, i32, i32
  }
}

</mosaic_0001>

<llo_original>
// kernel: pointnetfeat_forward.2
$region0: #{pointnetfeat_forward.2}
  #allocation0 [shape = 'u32[]', space=smem, size = 0x4, offset = 0x4, fixed_abs, tag = 'smem constant byte address 0x4 - core index']
  #allocation1 [shape = 'u32[72,128]{1,0:T(1,128)}', space=vmem, size = 0x9000, scoped, tag = 'internal scratch']
  %s0 = inlined_call_operand.vmem [shape: f32[2,16,3], index: 0, kind: input, shape index: {}]
  %s1 = inlined_call_operand.vmem [shape: f32[1,3,64], index: 1, kind: input, shape index: {}]
  %s2 = inlined_call_operand.vmem [shape: bf16[64,128], index: 2, kind: input, shape index: {}]
  %s3 = inlined_call_operand.vmem [shape: bf16[128,1024], index: 3, kind: input, shape index: {}]
  %s4 = inlined_call_operand.hbm [shape: f32[1,64], index: 4, kind: input, shape index: {}]
  %s5 = inlined_call_operand.hbm [shape: f32[1,128], index: 5, kind: input, shape index: {}]
  %s6 = inlined_call_operand.hbm [shape: f32[1,1024], index: 6, kind: input, shape index: {}]
  %s7 = inlined_call_operand.vmem [shape: f32[2,1,1024], index: 7, kind: output, shape index: {}]
  %s8 = sld [smem:[#allocation0]]
  $region81: #{pointnetfeat_forward.2} parent=0
    _
  %s10 = ssub.s32 1, %s8
  %s11 = scalar_select 0, %s10, %s8
  $region1: #{pointnetfeat_forward.2} parent=0
    #allocation2 [shape = 'u8[512]{0}', space=vmem, size = 0x400, scoped, tag = 'input window, operand 4, single buffered']
    #allocation3 [shape = 's32[2]{0}', space=sflag, size = 0x8, scoped, tag = 'scoped memory for pointnetfeat_forward.2']
    #allocation4 [shape = 'u8[512]{0}', space=vmem, size = 0x400, scoped, tag = 'input window, operand 5, single buffered']
    #allocation5 [shape = 's32[1]{0}', space=sflag, size = 0x4, scoped, tag = 'scoped memory for pointnetfeat_forward.2']
    #allocation6 [shape = 'u8[4096]{0}', space=vmem, size = 0x1000, scoped, tag = 'input window, operand 6, single buffered']
    %12 = vsyncpa [#allocation3], 0
    %13 = vsyncpa [#allocation5], 0
    loop: start=0, step=1, limit=4
    $region2: #{pointnetfeat_forward.2} parent=1 // loop_pre_header
      _
    $region3: #{pointnetfeat_forward.2} parent=1 // loop_header
      %s15 = sphi 0, %s19
      %p16 = scmp.ge.s32.totalorder %s15, 4
      %s22 = sphi 0, %s34
      %s23 = sphi 0, %s30
      %s24 = sphi 0, %s22
      %s25 = sphi 0, %s23
      %s26 = sphi 0, %s24
      %s27 = sphi 0, %s25
      %s39 = sphi 0, %s41
      %s42 = sphi 0, %s39
      %s43 = sphi 0, %s42
      %s59 = sphi 0, %s43
      %s63 = sphi 0, %s63
      %s65 = sphi 0, %s63
      %s66 = sphi 0, %s65
      %s80 = sphi 0, %s66
      %s84 = sphi 0, %s84
      %s86 = sphi 0, %s84
      %s87 = sphi 0, %s86
      %s101 = sphi 0, %s87
      %s105 = sphi 0, %s105
      %s107 = sphi 0, %s105
      %s108 = sphi 0, %s107
      %s122 = sphi 0, %s108
      %s126 = sphi 0, %s126
      %s128 = sphi 0, %s126
      %s129 = sphi 0, %s128
      %s143 = sphi 0, %s129
      %s147 = sphi 0, %s147
      %s149 = sphi 0, %s147
      %s150 = sphi 0, %s149
      %s164 = sphi 0, %s150
      %s168 = sphi 0, %s168
      %s170 = sphi 0, %s168
      %s171 = sphi 0, %s170
      %s185 = sphi 0, %s171
      %s191 = sphi 0, %s193
      %s194 = sphi 0, %s191
      %s195 = sphi 0, %s194
      %s211 = sphi 0, %s195
    $region4: #{pointnetfeat_forward.2} parent=1 // loop_header_branch
      %18 = sbr.rel (%p16) target = $region8
    $region5: #{pointnetfeat_forward.2} parent=1 // loop_body
      %s20 = ssub.s32 %s15, 1
      %s21 = ssub.s32 %s15, 2
      %s28 = sadd.s32 1, %s23
      %p29 = scmp.ge.s32.totalorder %s28, 1
      %s30 = scalar_select %p29, 0, %s28
      %s31 = sadd.s32 1, %s22
      %s32 = scalar_select %p29, %s31, %s22
      %p33 = scmp.ge.s32.totalorder %s32, 2
      %s34 = scalar_select %p33, 0, %s32
      %s35 = ssub.s32 %s22, %s34
      %s36 = ssub.s32 %s23, %s30
      %s37 = sor.u32 %s35, %s36
      %p38 = scmp.eq.s32.totalorder %s37, 0
      %s40 = sadd.s32 %s39, 1
      %s41 = scalar_select %p38, %s39, %s40
      %p44 = pneg %p38
      %p45 = scmp.eq.s32.totalorder %s15, 1
      %p46 = por %p44, %p45
      %p47 = scmp.ne.s32.totalorder %s39, %s42
      %p48 = scmp.eq.s32.totalorder %s15, 0
      %p49 = por %p47, %p48
      %p50 = scmp.ne.s32.totalorder %s39, %s42
      %p51 = scmp.eq.s32.totalorder %s20, 1
      %p52 = por %p50, %p51
      %p53 = scmp.ne.s32.totalorder %s42, %s43
      %p54 = scmp.eq.s32.totalorder %s20, 0
      %p55 = por %p53, %p54
      %p56 = scmp.ne.s32.totalorder %s42, %s43
      %p57 = scmp.eq.s32.totalorder %s21, 1
      %p58 = por %p56, %p57
      %p60 = scmp.ne.s32.totalorder %s43, %s59
      %p61 = scmp.eq.s32.totalorder %s21, 0
      %p62 = por %p60, %p61
      %s64 = sadd.s32 %s63, 1
      %p67 = scmp.eq.s32.totalorder %s15, 1
      %p68 = scmp.ne.s32.totalorder %s63, %s65
      %p69 = scmp.eq.s32.totalorder %s15, 0
      %p70 = por %p68, %p69
      %p71 = scmp.ne.s32.totalorder %s63, %s65
      %p72 = scmp.eq.s32.totalorder %s20, 1
      %p73 = por %p71, %p72
      %p74 = scmp.ne.s32.totalorder %s65, %s66
      %p75 = scmp.eq.s32.totalorder %s20, 0
      %p76 = por %p74, %p75
      %p77 = scmp.ne.s32.totalorder %s65, %s66
      %p78 = scmp.eq.s32.totalorder %s21, 1
      %p79 = por %p77, %p78
      %p81 = scmp.ne.s32.totalorder %s66, %s80
      %p82 = scmp.eq.s32.totalorder %s21, 0
      %p83 = por %p81, %p82
      %s85 = sadd.s32 %s84, 1
      %p88 = scmp.eq.s32.totalorder %s15, 1
      %p89 = scmp.ne.s32.totalorder %s84, %s86
      %p90 = scmp.eq.s32.totalorder %s15, 0
      %p91 = por %p89, %p90
      %p92 = scmp.ne.s32.totalorder %s84, %s86
      %p93 = scmp.eq.s32.totalorder %s20, 1
      %p94 = por %p92, %p93
      %p95 = scmp.ne.s32.totalorder %s86, %s87
      %p96 = scmp.eq.s32.totalorder %s20, 0
      %p97 = por %p95, %p96
      %p98 = scmp.ne.s32.totalorder %s86, %s87
      %p99 = scmp.eq.s32.totalorder %s21, 1
      %p100 = por %p98, %p99
      %p102 = scmp.ne.s32.totalorder %s87, %s101
      %p103 = scmp.eq.s32.totalorder %s21, 0
      %p104 = por %p102, %p103
      %s106 = sadd.s32 %s105, 1
      %p109 = scmp.eq.s32.totalorder %s15, 1
      %p110 = scmp.ne.s32.totalorder %s105, %s107
      %p111 = scmp.eq.s32.totalorder %s15, 0
      %p112 = por %p110, %p111
      %p113 = scmp.ne.s32.totalorder %s105, %s107
      %p114 = scmp.eq.s32.totalorder %s20, 1
      %p115 = por %p113, %p114
      %p116 = scmp.ne.s32.totalorder %s107, %s108
      %p117 = scmp.eq.s32.totalorder %s20, 0
      %p118 = por %p116, %p117
      %p119 = scmp.ne.s32.totalorder %s107, %s108
      %p120 = scmp.eq.s32.totalorder %s21, 1
      %p121 = por %p119, %p120
      %p123 = scmp.ne.s32.totalorder %s108, %s122
      %p124 = scmp.eq.s32.totalorder %s21, 0
      %p125 = por %p123, %p124
      %s127 = sadd.s32 %s126, 1
      %p130 = scmp.eq.s32.totalorder %s15, 1
      %p131 = scmp.ne.s32.totalorder %s126, %s128
      %p132 = scmp.eq.s32.totalorder %s15, 0
      %p133 = por %p131, %p132
      %p134 = scmp.ne.s32.totalorder %s126, %s128
      %p135 = scmp.eq.s32.totalorder %s20, 1
      %p136 = por %p134, %p135
      %p137 = scmp.ne.s32.totalorder %s128, %s129
      %p138 = scmp.eq.s32.totalorder %s20, 0
      %p139 = por %p137, %p138
      %p140 = scmp.ne.s32.totalorder %s128, %s129
      %p141 = scmp.eq.s32.totalorder %s21, 1
      %p142 = por %p140, %p141
      %p144 = scmp.ne.s32.totalorder %s129, %s143
      %p145 = scmp.eq.s32.totalorder %s21, 0
      %p146 = por %p144, %p145
      %s148 = sadd.s32 %s147, 1
      %p151 = scmp.eq.s32.totalorder %s15, 1
      %p152 = scmp.ne.s32.totalorder %s147, %s149
      %p153 = scmp.eq.s32.totalorder %s15, 0
      %p154 = por %p152, %p153
      %p155 = scmp.ne.s32.totalorder %s147, %s149
      %p156 = scmp.eq.s32.totalorder %s20, 1
      %p157 = por %p155, %p156
      %p158 = scmp.ne.s32.totalorder %s149, %s150
      %p159 = scmp.eq.s32.totalorder %s20, 0
      %p160 = por %p158, %p159
      %p161 = scmp.ne.s32.totalorder %s149, %s150
      %p162 = scmp.eq.s32.totalorder %s21, 1
      %p163 = por %p161, %p162
      %p165 = scmp.ne.s32.totalorder %s150, %s164
      %p166 = scmp.eq.s32.totalorder %s21, 0
      %p167 = por %p165, %p166
      %s169 = sadd.s32 %s168, 1
      %p172 = scmp.eq.s32.totalorder %s15, 1
      %p173 = scmp.ne.s32.totalorder %s168, %s170
      %p174 = scmp.eq.s32.totalorder %s15, 0
      %p175 = por %p173, %p174
      %p176 = scmp.ne.s32.totalorder %s168, %s170
      %p177 = scmp.eq.s32.totalorder %s20, 1
      %p178 = por %p176, %p177
      %p179 = scmp.ne.s32.totalorder %s170, %s171
      %p180 = scmp.eq.s32.totalorder %s20, 0
      %p181 = por %p179, %p180
      %p182 = scmp.ne.s32.totalorder %s170, %s171
      %p183 = scmp.eq.s32.totalorder %s21, 1
      %p184 = por %p182, %p183
      %p186 = scmp.ne.s32.totalorder %s171, %s185
      %p187 = scmp.eq.s32.totalorder %s21, 0
      %p188 = por %p186, %p187
      %s189 = ssub.s32 %s22, %s34
      %p190 = scmp.eq.s32.totalorder %s189, 0
      %s192 = sadd.s32 %s191, 1
      %s193 = scalar_select %p190, %s191, %s192
      %p196 = pneg %p190
      %p197 = scmp.eq.s32.totalorder %s15, 1
      %p198 = por %p196, %p197
      %p199 = scmp.ne.s32.totalorder %s191, %s194
      %p200 = scmp.eq.s32.totalorder %s15, 0
      %p201 = por %p199, %p200
      %p202 = scmp.ne.s32.totalorder %s191, %s194
      %p203 = scmp.eq.s32.totalorder %s20, 1
      %p204 = por %p202, %p203
      %p205 = scmp.ne.s32.totalorder %s194, %s195
      %p206 = scmp.eq.s32.totalorder %s20, 0
      %p207 = por %p205, %p206
      %p208 = scmp.ne.s32.totalorder %s194, %s195
      %p209 = scmp.eq.s32.totalorder %s21, 1
      %p210 = por %p208, %p209
      %p212 = scmp.ne.s32.totalorder %s195, %s211
      %p213 = scmp.eq.s32.totalorder %s21, 0
      %p214 = por %p212, %p213
      %p215 = scmp.le.s32.totalorder 1, %s15
      %p216 = scmp.lt.s32.totalorder %s15, 3
      %p217 = pnand %p215, %p216
      %p218 = pneg %p217
      // Predicated region
      $region9: #{pointnetfeat_forward.2} parent=5 // pred_check
        _
      $region10: #{pointnetfeat_forward.2} parent=5 // pred_check_branch
        %220 = sbr.rel (%p217) target = $region12
      $region11: #{pointnetfeat_forward.2} parent=5 // pred_region
        %s221 = ssub.s32 %s15, 1
        // Predicated region
        $region13: #{pointnetfeat_forward.2} parent=11 // pred_check
          %p222 = pneg %p76
        $region14: #{pointnetfeat_forward.2} parent=11 // pred_check_branch
          %224 = sbr.rel (%p222) target = $region16
        $region15: #{pointnetfeat_forward.2} parent=11 // pred_region
          _
        $region16: #{pointnetfeat_forward.2} parent=11 // pred_fallthru
          _
        // Predicated region
        $region17: #{pointnetfeat_forward.2} parent=11 // pred_check
          %p225 = pneg %p97
        $region18: #{pointnetfeat_forward.2} parent=11 // pred_check_branch
          %227 = sbr.rel (%p225) target = $region20
        $region19: #{pointnetfeat_forward.2} parent=11 // pred_region
          _
        $region20: #{pointnetfeat_forward.2} parent=11 // pred_fallthru
          _
        // Predicated region
        $region21: #{pointnetfeat_forward.2} parent=11 // pred_check
          %p228 = pneg %p118
        $region22: #{pointnetfeat_forward.2} parent=11 // pred_check_branch
          %230 = sbr.rel (%p228) target = $region24
        $region23: #{pointnetfeat_forward.2} parent=11 // pred_region
          _
        $region24: #{pointnetfeat_forward.2} parent=11 // pred_fallthru
          _
        // Predicated region
        $region25: #{pointnetfeat_forward.2} parent=11 // pred_check
          %p231 = pneg %p139
        $region26: #{pointnetfeat_forward.2} parent=11 // pred_check_branch
          %233 = sbr.rel (%p231) target = $region28
        $region27: #{pointnetfeat_forward.2} parent=11 // pred_region
          %235 = vsyncadd [#allocation3], 0
          %s237 = sshll.u32 %s4, 4
          %s238 = int_to_ptr.hbm [resolvable:$true] %s237
          %s239 = sshll.u32 [#allocation2], 4
          %s240 = int_to_ptr.vmem [resolvable:$true] %s239
          %242 = dma.hbm_to_vmem [thread:$0]  %s238, 16, %s240, [#allocation3]
        $region28: #{pointnetfeat_forward.2} parent=11 // pred_fallthru
          _
        // Predicated region
        $region29: #{pointnetfeat_forward.2} parent=11 // pred_check
          %p243 = pneg %p160
        $region30: #{pointnetfeat_forward.2} parent=11 // pred_check_branch
          %245 = sbr.rel (%p243) target = $region32
        $region31: #{pointnetfeat_forward.2} parent=11 // pred_region
          %247 = vsyncadd [#allocation5], 0
          %s249 = sshll.u32 %s5, 4
          %s250 = int_to_ptr.hbm [resolvable:$true] %s249
          %s251 = sshll.u32 [#allocation4], 4
          %s252 = int_to_ptr.vmem [resolvable:$true] %s251
          %254 = dma.hbm_to_vmem [thread:$0]  %s250, 16, %s252, [#allocation5]
        $region32: #{pointnetfeat_forward.2} parent=11 // pred_fallthru
          _
        // Predicated region
        $region33: #{pointnetfeat_forward.2} parent=11 // pred_check
          %p255 = pneg %p181
        $region34: #{pointnetfeat_forward.2} parent=11 // pred_check_branch
          %257 = sbr.rel (%p255) target = $region36
        $region35: #{pointnetfeat_forward.2} parent=11 // pred_region
          %259 = vsyncadd [#allocation5], 0
          %s261 = sshll.u32 %s6, 4
          %s262 = int_to_ptr.hbm [resolvable:$true] %s261
          %s263 = sshll.u32 [#allocation6], 4
          %s264 = int_to_ptr.vmem [resolvable:$true] %s263
          %266 = dma.hbm_to_vmem [thread:$0]  %s262, 128, %s264, [#allocation5]
        $region36: #{pointnetfeat_forward.2} parent=11 // pred_fallthru
          _
      $region12: #{pointnetfeat_forward.2} parent=5 // pred_fallthru
        _
      %p267 = scmp.lt.s32.totalorder %s15, 2
      // Predicated region
      $region37: #{pointnetfeat_forward.2} parent=5 // pred_check
        %p268 = pneg %p267
      $region38: #{pointnetfeat_forward.2} parent=5 // pred_check_branch
        %270 = sbr.rel (%p268) target = $region40
      $region39: #{pointnetfeat_forward.2} parent=5 // pred_region
        // Predicated region
        $region41: #{pointnetfeat_forward.2} parent=39 // pred_check
          %p271 = pneg %p49
        $region42: #{pointnetfeat_forward.2} parent=39 // pred_check_branch
          %273 = sbr.rel (%p271) target = $region44
        $region43: #{pointnetfeat_forward.2} parent=39 // pred_region
          %s274 = smul.u32 2, %s23
          %p275 = scmp.lt.s32.totalorder %s22, 1
          %s276 = scalar_select %p275, %s22, 1
          %p277 = scmp.lt.s32.totalorder %s274, 1
          %s278 = scalar_select %p277, %s274, 1
          %s279 = smul.addr %s276, 2
          %s280 = sadd.s32 %s278, %s279
          %s281 = smul.addr %s280, 8
          %s282 = scalar_lea.vmem %s0, %s281
          %s283 = smul.u32 2, %s23
        $region44: #{pointnetfeat_forward.2} parent=39 // pred_fallthru
          _
      $region40: #{pointnetfeat_forward.2} parent=5 // pred_fallthru
        _
      %p284 = scmp.le.s32.totalorder 1, %s15
      %p285 = scmp.lt.s32.totalorder %s15, 3
      %p286 = pnand %p284, %p285
      %p287 = pneg %p286
      // Predicated region
      $region45: #{pointnetfeat_forward.2} parent=5 // pred_check
        _
      $region46: #{pointnetfeat_forward.2} parent=5 // pred_check_branch
        %289 = sbr.rel (%p286) target = $region48
      $region47: #{pointnetfeat_forward.2} parent=5 // pred_region
        %s290 = ssub.s32 %s15, 1
        // Predicated region
        $region49: #{pointnetfeat_forward.2} parent=47 // pred_check
          %p291 = pneg %p139
        $region50: #{pointnetfeat_forward.2} parent=47 // pred_check_branch
          %293 = sbr.rel (%p291) target = $region52
        $region51: #{pointnetfeat_forward.2} parent=47 // pred_region
          %295 = dma.done [#allocation3], 16
        $region52: #{pointnetfeat_forward.2} parent=47 // pred_fallthru
          _
        // Predicated region
        $region53: #{pointnetfeat_forward.2} parent=47 // pred_check
          %p296 = pneg %p160
        $region54: #{pointnetfeat_forward.2} parent=47 // pred_check_branch
          %298 = sbr.rel (%p296) target = $region56
        $region55: #{pointnetfeat_forward.2} parent=47 // pred_region
          %300 = dma.done [#allocation5], 16
        $region56: #{pointnetfeat_forward.2} parent=47 // pred_fallthru
          _
        // Predicated region
        $region57: #{pointnetfeat_forward.2} parent=47 // pred_check
          %p301 = pneg %p181
        $region58: #{pointnetfeat_forward.2} parent=47 // pred_check_branch
          %303 = sbr.rel (%p301) target = $region60
        $region59: #{pointnetfeat_forward.2} parent=47 // pred_region
          %305 = dma.done [#allocation5], 128
        $region60: #{pointnetfeat_forward.2} parent=47 // pred_fallthru
          _
        %s306 = smul.u32 2, %s25
        %p307 = scmp.lt.s32.totalorder %s24, 1
        %s308 = scalar_select %p307, %s24, 1
        %p309 = scmp.lt.s32.totalorder %s306, 1
        %s310 = scalar_select %p309, %s306, 1
        %s311 = smul.addr %s308, 2
        %s312 = sadd.s32 %s310, %s311
        %s313 = smul.addr %s312, 8
        %s314 = scalar_lea.vmem %s0, %s313
        %p315 = pneg %p55
        %p316 = pneg %p52
        %p317 = pneg %p76
        %p318 = pneg %p73
        %p319 = pneg %p97
        %p320 = pneg %p94
        %p321 = pneg %p118
        %p322 = pneg %p115
        %p323 = pneg %p139
        %p324 = pneg %p136
        %p325 = pneg %p160
        %p326 = pneg %p157
        %p327 = pneg %p181
        %p328 = pneg %p178
        %p329 = pneg %p207
        %p330 = pneg %p204
        %p331 = scmp.lt.s32.totalorder %s24, 1
        %s332 = scalar_select %p331, %s24, 1
        %s333 = smul.addr %s332, 8
        %s334 = scalar_lea.vmem %s7, %s333
        %s335 = smul.u32 2, %s25
        %p336 = scmp.lt.s32.totalorder %s24, 1
        %s337 = scalar_select %p336, %s24, 1
        %p338 = scmp.lt.s32.totalorder %s335, 1
        %s339 = scalar_select %p338, %s335, 1
        %s340 = smul.addr %s337, 2
        %s341 = sadd.s32 %s339, %s340
        %s342 = smul.addr %s341, 8
        %s343 = scalar_lea.vmem %s0, %s342
        %s344 = smul.u32 2, %s25
        %p345 = scmp.lt.s32.totalorder %s24, 1
        %s346 = scalar_select %p345, %s24, 1
        %s347 = smul.addr %s346, 8
        %s348 = scalar_lea.vmem %s7, %s347
        %v350 = vld [vmem:[%s343] sm:$0xff]
        %v351 = vld [vmem:[%s343 + $0x8] sm:$0xff]
        %v352 = vld [vmem:[%s1] sm:$0x7]
        %354 = vset.pattern.permute.xlu0 0
        %355 = vperm.xlu0 %354, %v350
        %v356 = vpop.permute.xlu0 %355
        %359 = vset.pattern.permute.xlu0 0
        %360 = vperm.xlu0 %359, %v351
        %v361 = vpop.permute.xlu0 %360
        %v363 = vperm.slane %v352, 0
        %v364 = vmul.f32 %v356, %v363
        %v365 = vmul.f32 %v361, %v363
        %366 = vset.pattern.permute.xlu0 1
        %367 = vperm.xlu0 %366, %v350
        %v368 = vpop.permute.xlu0 %367
        %370 = vset.pattern.permute.xlu0 1
        %371 = vperm.xlu0 %370, %v351
        %v372 = vpop.permute.xlu0 %371
        %v374 = vperm.slane %v352, 1
        %v375 = vmul.f32 %v368, %v374
        %v376 = vmul.f32 %v372, %v374
        %v377 = vadd.f32 %v364, %v375
        %v378 = vadd.f32 %v365, %v376
        %379 = vset.pattern.permute.xlu0 2
        %380 = vperm.xlu0 %379, %v350
        %v381 = vpop.permute.xlu0 %380
        %383 = vset.pattern.permute.xlu0 2
        %384 = vperm.xlu0 %383, %v351
        %v385 = vpop.permute.xlu0 %384
        %v387 = vperm.slane %v352, 2
        %v388 = vmul.f32 %v381, %v387
        %v389 = vmul.f32 %v385, %v387
        %v390 = vadd.f32 %v377, %v388
        %v391 = vadd.f32 %v378, %v389
        %v392 = vld [vmem:[#allocation2] sm:$0x1]
        %v394 = vperm.slane %v392, 0
        %v396 = vadd.f32 %v390, %v394
        %v397 = vadd.f32 %v391, %v394
        %v398 = vmax.f32 %v396, 0.0
        %v399 = vmax.f32 %v397, 0.0
        %v400 = vpack.c.bf16 %v399, %v398
        %v401 = vld [vmem:[%s2] sm:$0xf]
        %v402 = vld [vmem:[%s2 + $0x4] sm:$0xf]
        %v403 = vld [vmem:[%s2 + $0x8] sm:$0xf]
        %v404 = vld [vmem:[%s2 + $0xc] sm:$0xf]
        %v405 = vld [vmem:[%s2 + $0x10] sm:$0xf]
        %v406 = vld [vmem:[%s2 + $0x14] sm:$0xf]
        %v407 = vld [vmem:[%s2 + $0x18] sm:$0xf]
        %v408 = vld [vmem:[%s2 + $0x1c] sm:$0xf]
        %v409 = vld [vmem:[#allocation4] sm:$0x1]
        %v411 = vperm.slane %v409, 0
        %v421 = vunpack.c.l.b16 %v401
        %v422 = vunpack.c.l.b16 %v402
        %v423 = vunpack.c.l.b16 %v403
        %v424 = vunpack.c.l.b16 %v404
        %v425 = vunpack.c.l.b16 %v405
        %v426 = vunpack.c.l.b16 %v406
        %v427 = vunpack.c.l.b16 %v407
        %v428 = vunpack.c.l.b16 %v408
        %v429 = vpack.c.b16 %v422, %v421
        %v430 = vpack.c.b16 %v424, %v423
        %v431 = vpack.c.b16 %v426, %v425
        %v432 = vpack.c.b16 %v428, %v427
        %vm437 = vcmask 523264
        %v439 = vsel %vm437, %v400, 0
        %441 = vmatpush.bf16.msra.mxu0 0
        %442 = vmatpush.bf16.msra.mxu0 0
        %443 = vmatpush.bf16.msra.mxu0 0
        %444 = vmatpush.bf16.msra.mxu0 0
        %445 = vmatpush.bf16.msra.mxu0 %v432
        %446 = vmatpush.bf16.msra.mxu0 %v431
        %447 = vmatpush.bf16.msra.mxu0 %v430
        %448 = vmatpush.bf16.msra.mxu0 %v429
        %449 = vmatmul.bf16.gmra.mxu0 %v439
        %v450 = vpop.f32.mrf.mxu0
        %v451 = vadd.f32 %v411, %v450
        %v452 = vpop.f32.mrf.mxu0
        %v453 = vadd.f32 %v411, %v452
        %454 = vdwg.mxu0
        %v455 = vmax.f32 %v451, 0.0
        %v456 = vmax.f32 %v453, 0.0
        %v457 = vpack.c.bf16 %v456, %v455
        %v458 = vld [vmem:[%s3] sm:$0xff]
        %v459 = vld [vmem:[%s3 + $0x8] sm:$0xff]
        %v460 = vld [vmem:[%s3 + $0x10] sm:$0xff]
        %v461 = vld [vmem:[%s3 + $0x18] sm:$0xff]
        %v462 = vld [vmem:[%s3 + $0x20] sm:$0xff]
        %v463 = vld [vmem:[%s3 + $0x28] sm:$0xff]
        %v464 = vld [vmem:[%s3 + $0x30] sm:$0xff]
        %v465 = vld [vmem:[%s3 + $0x38] sm:$0xff]
        %v466 = vld [vmem:[%s3 + $0x40] sm:$0xff]
        %v467 = vld [vmem:[%s3 + $0x48] sm:$0xff]
        %v468 = vld [vmem:[%s3 + $0x50] sm:$0xff]
        %v469 = vld [vmem:[%s3 + $0x58] sm:$0xff]
        %v470 = vld [vmem:[%s3 + $0x60] sm:$0xff]
        %v471 = vld [vmem:[%s3 + $0x68] sm:$0xff]
        %v472 = vld [vmem:[%s3 + $0x70] sm:$0xff]
        %v473 = vld [vmem:[%s3 + $0x78] sm:$0xff]
        %v474 = vld [vmem:[%s3 + $0x80] sm:$0xff]
        %v475 = vld [vmem:[%s3 + $0x88] sm:$0xff]
        %v476 = vld [vmem:[%s3 + $0x90] sm:$0xff]
        %v477 = vld [vmem:[%s3 + $0x98] sm:$0xff]
        %v478 = vld [vmem:[%s3 + $0xa0] sm:$0xff]
        %v479 = vld [vmem:[%s3 + $0xa8] sm:$0xff]
        %v480 = vld [vmem:[%s3 + $0xb0] sm:$0xff]
        %v481 = vld [vmem:[%s3 + $0xb8] sm:$0xff]
        %v482 = vld [vmem:[%s3 + $0xc0] sm:$0xff]
        %v483 = vld [vmem:[%s3 + $0xc8] sm:$0xff]
        %v484 = vld [vmem:[%s3 + $0xd0] sm:$0xff]
        %v485 = vld [vmem:[%s3 + $0xd8] sm:$0xff]
        %v486 = vld [vmem:[%s3 + $0xe0] sm:$0xff]
        %v487 = vld [vmem:[%s3 + $0xe8] sm:$0xff]
        %v488 = vld [vmem:[%s3 + $0xf0] sm:$0xff]
        %v489 = vld [vmem:[%s3 + $0xf8] sm:$0xff]
        %v490 = vld [vmem:[%s3 + $0x100] sm:$0xff]
        %v491 = vld [vmem:[%s3 + $0x108] sm:$0xff]
        %v492 = vld [vmem:[%s3 + $0x110] sm:$0xff]
        %v493 = vld [vmem:[%s3 + $0x118] sm:$0xff]
        %v494 = vld [vmem:[%s3 + $0x120] sm:$0xff]
        %v495 = vld [vmem:[%s3 + $0x128] sm:$0xff]
        %v496 = vld [vmem:[%s3 + $0x130] sm:$0xff]
        %v497 = vld [vmem:[%s3 + $0x138] sm:$0xff]
        %v498 = vld [vmem:[%s3 + $0x140] sm:$0xff]
        %v499 = vld [vmem:[%s3 + $0x148] sm:$0xff]
        %v500 = vld [vmem:[%s3 + $0x150] sm:$0xff]
        %v501 = vld [vmem:[%s3 + $0x158] sm:$0xff]
        %v502 = vld [vmem:[%s3 + $0x160] sm:$0xff]
        %v503 = vld [vmem:[%s3 + $0x168] sm:$0xff]
        %v504 = vld [vmem:[%s3 + $0x170] sm:$0xff]
        %v505 = vld [vmem:[%s3 + $0x178] sm:$0xff]
        %v506 = vld [vmem:[%s3 + $0x180] sm:$0xff]
        %v507 = vld [vmem:[%s3 + $0x188] sm:$0xff]
        %v508 = vld [vmem:[%s3 + $0x190] sm:$0xff]
        %v509 = vld [vmem:[%s3 + $0x198] sm:$0xff]
        %v510 = vld [vmem:[%s3 + $0x1a0] sm:$0xff]
        %v511 = vld [vmem:[%s3 + $0x1a8] sm:$0xff]
        %v512 = vld [vmem:[%s3 + $0x1b0] sm:$0xff]
        %v513 = vld [vmem:[%s3 + $0x1b8] sm:$0xff]
        %v514 = vld [vmem:[%s3 + $0x1c0] sm:$0xff]
        %v515 = vld [vmem:[%s3 + $0x1c8] sm:$0xff]
        %v516 = vld [vmem:[%s3 + $0x1d0] sm:$0xff]
        %v517 = vld [vmem:[%s3 + $0x1d8] sm:$0xff]
        %v518 = vld [vmem:[%s3 + $0x1e0] sm:$0xff]
        %v519 = vld [vmem:[%s3 + $0x1e8] sm:$0xff]
        %v520 = vld [vmem:[%s3 + $0x1f0] sm:$0xff]
        %v521 = vld [vmem:[%s3 + $0x1f8] sm:$0xff]
        %v522 = vld [vmem:[#allocation6] sm:$0xff]
        %v524 = vperm.slane %v522, 0
        %v525 = vperm.slane %v522, 1
        %v526 = vperm.slane %v522, 2
        %v527 = vperm.slane %v522, 3
        %v528 = vperm.slane %v522, 4
        %v529 = vperm.slane %v522, 5
        %v530 = vperm.slane %v522, 6
        %v531 = vperm.slane %v522, 7
        %v604 = vunpack.c.l.b16 %v458
        %v605 = vunpack.c.h.b16 %v458
        %v606 = vunpack.c.l.b16 %v459
        %v607 = vunpack.c.h.b16 %v459
        %v608 = vunpack.c.l.b16 %v460
        %v609 = vunpack.c.h.b16 %v460
        %v610 = vunpack.c.l.b16 %v461
        %v611 = vunpack.c.h.b16 %v461
        %v612 = vunpack.c.l.b16 %v462
        %v613 = vunpack.c.h.b16 %v462
        %v614 = vunpack.c.l.b16 %v463
        %v615 = vunpack.c.h.b16 %v463
        %v616 = vunpack.c.l.b16 %v464
        %v617 = vunpack.c.h.b16 %v464
        %v618 = vunpack.c.l.b16 %v465
        %v619 = vunpack.c.h.b16 %v465
        %v620 = vunpack.c.l.b16 %v466
        %v621 = vunpack.c.h.b16 %v466
        %v622 = vunpack.c.l.b16 %v467
        %v623 = vunpack.c.h.b16 %v467
        %v624 = vunpack.c.l.b16 %v468
        %v625 = vunpack.c.h.b16 %v468
        %v626 = vunpack.c.l.b16 %v469
        %v627 = vunpack.c.h.b16 %v469
        %v628 = vunpack.c.l.b16 %v470
        %v629 = vunpack.c.h.b16 %v470
        %v630 = vunpack.c.l.b16 %v471
        %v631 = vunpack.c.h.b16 %v471
        %v632 = vunpack.c.l.b16 %v472
        %v633 = vunpack.c.h.b16 %v472
        %v634 = vunpack.c.l.b16 %v473
        %v635 = vunpack.c.h.b16 %v473
        %v636 = vunpack.c.l.b16 %v474
        %v637 = vunpack.c.h.b16 %v474
        %v638 = vunpack.c.l.b16 %v475
        %v639 = vunpack.c.h.b16 %v475
        %v640 = vunpack.c.l.b16 %v476
        %v641 = vunpack.c.h.b16 %v476
        %v642 = vunpack.c.l.b16 %v477
        %v643 = vunpack.c.h.b16 %v477
        %v644 = vunpack.c.l.b16 %v478
        %v645 = vunpack.c.h.b16 %v478
        %v646 = vunpack.c.l.b16 %v479
        %v647 = vunpack.c.h.b16 %v479
        %v648 = vunpack.c.l.b16 %v480
        %v649 = vunpack.c.h.b16 %v480
        %v650 = vunpack.c.l.b16 %v481
        %v651 = vunpack.c.h.b16 %v481
        %v652 = vunpack.c.l.b16 %v482
        %v653 = vunpack.c.h.b16 %v482
        %v654 = vunpack.c.l.b16 %v483
        %v655 = vunpack.c.h.b16 %v483
        %v656 = vunpack.c.l.b16 %v484
        %v657 = vunpack.c.h.b16 %v484
        %v658 = vunpack.c.l.b16 %v485
        %v659 = vunpack.c.h.b16 %v485
        %v660 = vunpack.c.l.b16 %v486
        %v661 = vunpack.c.h.b16 %v486
        %v662 = vunpack.c.l.b16 %v487
        %v663 = vunpack.c.h.b16 %v487
        %v664 = vunpack.c.l.b16 %v488
        %v665 = vunpack.c.h.b16 %v488
        %v666 = vunpack.c.l.b16 %v489
        %v667 = vunpack.c.h.b16 %v489
        %v668 = vunpack.c.l.b16 %v490
        %v669 = vunpack.c.h.b16 %v490
        %v670 = vunpack.c.l.b16 %v491
        %v671 = vunpack.c.h.b16 %v491
        %v672 = vunpack.c.l.b16 %v492
        %v673 = vunpack.c.h.b16 %v492
        %v674 = vunpack.c.l.b16 %v493
        %v675 = vunpack.c.h.b16 %v493
        %v676 = vunpack.c.l.b16 %v494
        %v677 = vunpack.c.h.b16 %v494
        %v678 = vunpack.c.l.b16 %v495
        %v679 = vunpack.c.h.b16 %v495
        %v680 = vunpack.c.l.b16 %v496
        %v681 = vunpack.c.h.b16 %v496
        %v682 = vunpack.c.l.b16 %v497
        %v683 = vunpack.c.h.b16 %v497
        %v684 = vunpack.c.l.b16 %v498
        %v685 = vunpack.c.h.b16 %v498
        %v686 = vunpack.c.l.b16 %v499
        %v687 = vunpack.c.h.b16 %v499
        %v688 = vunpack.c.l.b16 %v500
        %v689 = vunpack.c.h.b16 %v500
        %v690 = vunpack.c.l.b16 %v501
        %v691 = vunpack.c.h.b16 %v501
        %v692 = vunpack.c.l.b16 %v502
        %v693 = vunpack.c.h.b16 %v502
        %v694 = vunpack.c.l.b16 %v503
        %v695 = vunpack.c.h.b16 %v503
        %v696 = vunpack.c.l.b16 %v504
        %v697 = vunpack.c.h.b16 %v504
        %v698 = vunpack.c.l.b16 %v505
        %v699 = vunpack.c.h.b16 %v505
        %v700 = vunpack.c.l.b16 %v506
        %v701 = vunpack.c.h.b16 %v506
        %v702 = vunpack.c.l.b16 %v507
        %v703 = vunpack.c.h.b16 %v507
        %v704 = vunpack.c.l.b16 %v508
        %v705 = vunpack.c.h.b16 %v508
        %v706 = vunpack.c.l.b16 %v509
        %v707 = vunpack.c.h.b16 %v509
        %v708 = vunpack.c.l.b16 %v510
        %v709 = vunpack.c.h.b16 %v510
        %v710 = vunpack.c.l.b16 %v511
        %v711 = vunpack.c.h.b16 %v511
        %v712 = vunpack.c.l.b16 %v512
        %v713 = vunpack.c.h.b16 %v512
        %v714 = vunpack.c.l.b16 %v513
        %v715 = vunpack.c.h.b16 %v513
        %v716 = vunpack.c.l.b16 %v514
        %v717 = vunpack.c.h.b16 %v514
        %v718 = vunpack.c.l.b16 %v515
        %v719 = vunpack.c.h.b16 %v515
        %v720 = vunpack.c.l.b16 %v516
        %v721 = vunpack.c.h.b16 %v516
        %v722 = vunpack.c.l.b16 %v517
        %v723 = vunpack.c.h.b16 %v517
        %v724 = vunpack.c.l.b16 %v518
        %v725 = vunpack.c.h.b16 %v518
        %v726 = vunpack.c.l.b16 %v519
        %v727 = vunpack.c.h.b16 %v519
        %v728 = vunpack.c.l.b16 %v520
        %v729 = vunpack.c.h.b16 %v520
        %v730 = vunpack.c.l.b16 %v521
        %v731 = vunpack.c.h.b16 %v521
        %v732 = vpack.c.b16 %v612, %v604
        %v733 = vpack.c.b16 %v613, %v605
        %v734 = vpack.c.b16 %v614, %v606
        %v735 = vpack.c.b16 %v615, %v607
        %v736 = vpack.c.b16 %v616, %v608
        %v737 = vpack.c.b16 %v617, %v609
        %v738 = vpack.c.b16 %v618, %v610
        %v739 = vpack.c.b16 %v619, %v611
        %v740 = vpack.c.b16 %v628, %v620
        %v741 = vpack.c.b16 %v629, %v621
        %v742 = vpack.c.b16 %v630, %v622
        %v743 = vpack.c.b16 %v631, %v623
        %v744 = vpack.c.b16 %v632, %v624
        %v745 = vpack.c.b16 %v633, %v625
        %v746 = vpack.c.b16 %v634, %v626
        %v747 = vpack.c.b16 %v635, %v627
        %v748 = vpack.c.b16 %v644, %v636
        %v749 = vpack.c.b16 %v645, %v637
        %v750 = vpack.c.b16 %v646, %v638
        %v751 = vpack.c.b16 %v647, %v639
        %v752 = vpack.c.b16 %v648, %v640
        %v753 = vpack.c.b16 %v649, %v641
        %v754 = vpack.c.b16 %v650, %v642
        %v755 = vpack.c.b16 %v651, %v643
        %v756 = vpack.c.b16 %v660, %v652
        %v757 = vpack.c.b16 %v661, %v653
        %v758 = vpack.c.b16 %v662, %v654
        %v759 = vpack.c.b16 %v663, %v655
        %v760 = vpack.c.b16 %v664, %v656
        %v761 = vpack.c.b16 %v665, %v657
        %v762 = vpack.c.b16 %v666, %v658
        %v763 = vpack.c.b16 %v667, %v659
        %v764 = vpack.c.b16 %v676, %v668
        %v765 = vpack.c.b16 %v677, %v669
        %v766 = vpack.c.b16 %v678, %v670
        %v767 = vpack.c.b16 %v679, %v671
        %v768 = vpack.c.b16 %v680, %v672
        %v769 = vpack.c.b16 %v681, %v673
        %v770 = vpack.c.b16 %v682, %v674
        %v771 = vpack.c.b16 %v683, %v675
        %v772 = vpack.c.b16 %v692, %v684
        %v773 = vpack.c.b16 %v693, %v685
        %v774 = vpack.c.b16 %v694, %v686
        %v775 = vpack.c.b16 %v695, %v687
        %v776 = vpack.c.b16 %v696, %v688
        %v777 = vpack.c.b16 %v697, %v689
        %v778 = vpack.c.b16 %v698, %v690
        %v779 = vpack.c.b16 %v699, %v691
        %v780 = vpack.c.b16 %v708, %v700
        %v781 = vpack.c.b16 %v709, %v701
        %v782 = vpack.c.b16 %v710, %v702
        %v783 = vpack.c.b16 %v711, %v703
        %v784 = vpack.c.b16 %v712, %v704
        %v785 = vpack.c.b16 %v713, %v705
        %v786 = vpack.c.b16 %v714, %v706
        %v787 = vpack.c.b16 %v715, %v707
        %v788 = vpack.c.b16 %v724, %v716
        %v789 = vpack.c.b16 %v725, %v717
        %v790 = vpack.c.b16 %v726, %v718
        %v791 = vpack.c.b16 %v727, %v719
        %v792 = vpack.c.b16 %v728, %v720
        %v793 = vpack.c.b16 %v729, %v721
        %v794 = vpack.c.b16 %v730, %v722
        %v795 = vpack.c.b16 %v731, %v723
        %860 = vmatpush.bf16.msra.mxu0 %v788
        %861 = vmatpush.bf16.msra.mxu0 %v780
        %862 = vmatpush.bf16.msra.mxu0 %v772
        %863 = vmatpush.bf16.msra.mxu0 %v764
        %864 = vmatpush.bf16.msra.mxu0 %v756
        %865 = vmatpush.bf16.msra.mxu0 %v748
        %866 = vmatpush.bf16.msra.mxu0 %v740
        %867 = vmatpush.bf16.msra.mxu0 %v732
        %868 = vmatmul.bf16.gmra.mxu0 %v457
        %v869 = vpop.f32.mrf.mxu0
        %v870 = vadd.f32 %v524, %v869
        %v871 = vpop.f32.mrf.mxu0
        %v872 = vadd.f32 %v524, %v871
        %873 = vdwg.mxu0
        %874 = vmatpush.bf16.msra.mxu0 %v789
        %875 = vmatpush.bf16.msra.mxu0 %v781
        %876 = vmatpush.bf16.msra.mxu0 %v773
        %877 = vmatpush.bf16.msra.mxu0 %v765
        %878 = vmatpush.bf16.msra.mxu0 %v757
        %879 = vmatpush.bf16.msra.mxu0 %v749
        %880 = vmatpush.bf16.msra.mxu0 %v741
        %881 = vmatpush.bf16.msra.mxu0 %v733
        %882 = vmatmul.bf16.gmra.mxu0 %v457
        %v883 = vpop.f32.mrf.mxu0
        %v884 = vadd.f32 %v525, %v883
        %v885 = vpop.f32.mrf.mxu0
        %v886 = vadd.f32 %v525, %v885
        %887 = vdwg.mxu0
        %888 = vmatpush.bf16.msra.mxu0 %v790
        %889 = vmatpush.bf16.msra.mxu0 %v782
        %890 = vmatpush.bf16.msra.mxu0 %v774
        %891 = vmatpush.bf16.msra.mxu0 %v766
        %892 = vmatpush.bf16.msra.mxu0 %v758
        %893 = vmatpush.bf16.msra.mxu0 %v750
        %894 = vmatpush.bf16.msra.mxu0 %v742
        %895 = vmatpush.bf16.msra.mxu0 %v734
        %896 = vmatmul.bf16.gmra.mxu0 %v457
        %v897 = vpop.f32.mrf.mxu0
        %v898 = vadd.f32 %v526, %v897
        %v899 = vpop.f32.mrf.mxu0
        %v900 = vadd.f32 %v526, %v899
        %901 = vdwg.mxu0
        %902 = vmatpush.bf16.msra.mxu0 %v791
        %903 = vmatpush.bf16.msra.mxu0 %v783
        %904 = vmatpush.bf16.msra.mxu0 %v775
        %905 = vmatpush.bf16.msra.mxu0 %v767
        %906 = vmatpush.bf16.msra.mxu0 %v759
        %907 = vmatpush.bf16.msra.mxu0 %v751
        %908 = vmatpush.bf16.msra.mxu0 %v743
        %909 = vmatpush.bf16.msra.mxu0 %v735
        %910 = vmatmul.bf16.gmra.mxu0 %v457
        %v911 = vpop.f32.mrf.mxu0
        %v912 = vadd.f32 %v527, %v911
        %v913 = vpop.f32.mrf.mxu0
        %v914 = vadd.f32 %v527, %v913
        %915 = vdwg.mxu0
        %916 = vmatpush.bf16.msra.mxu0 %v792
        %917 = vmatpush.bf16.msra.mxu0 %v784
        %918 = vmatpush.bf16.msra.mxu0 %v776
        %919 = vmatpush.bf16.msra.mxu0 %v768
        %920 = vmatpush.bf16.msra.mxu0 %v760
        %921 = vmatpush.bf16.msra.mxu0 %v752
        %922 = vmatpush.bf16.msra.mxu0 %v744
        %923 = vmatpush.bf16.msra.mxu0 %v736
        %924 = vmatmul.bf16.gmra.mxu0 %v457
        %v925 = vpop.f32.mrf.mxu0
        %v926 = vadd.f32 %v528, %v925
        %v927 = vpop.f32.mrf.mxu0
        %v928 = vadd.f32 %v528, %v927
        %929 = vdwg.mxu0
        %930 = vmatpush.bf16.msra.mxu0 %v793
        %931 = vmatpush.bf16.msra.mxu0 %v785
        %932 = vmatpush.bf16.msra.mxu0 %v777
        %933 = vmatpush.bf16.msra.mxu0 %v769
        %934 = vmatpush.bf16.msra.mxu0 %v761
        %935 = vmatpush.bf16.msra.mxu0 %v753
        %936 = vmatpush.bf16.msra.mxu0 %v745
        %937 = vmatpush.bf16.msra.mxu0 %v737
        %938 = vmatmul.bf16.gmra.mxu0 %v457
        %v939 = vpop.f32.mrf.mxu0
        %v940 = vadd.f32 %v529, %v939
        %v941 = vpop.f32.mrf.mxu0
        %v942 = vadd.f32 %v529, %v941
        %943 = vdwg.mxu0
        %944 = vmatpush.bf16.msra.mxu0 %v794
        %945 = vmatpush.bf16.msra.mxu0 %v786
        %946 = vmatpush.bf16.msra.mxu0 %v778
        %947 = vmatpush.bf16.msra.mxu0 %v770
        %948 = vmatpush.bf16.msra.mxu0 %v762
        %949 = vmatpush.bf16.msra.mxu0 %v754
        %950 = vmatpush.bf16.msra.mxu0 %v746
        %951 = vmatpush.bf16.msra.mxu0 %v738
        %952 = vmatmul.bf16.gmra.mxu0 %v457
        %v953 = vpop.f32.mrf.mxu0
        %v954 = vadd.f32 %v530, %v953
        %v955 = vpop.f32.mrf.mxu0
        %v956 = vadd.f32 %v530, %v955
        %957 = vdwg.mxu0
        %958 = vmatpush.bf16.msra.mxu0 %v795
        %959 = vmatpush.bf16.msra.mxu0 %v787
        %960 = vmatpush.bf16.msra.mxu0 %v779
        %961 = vmatpush.bf16.msra.mxu0 %v771
        %962 = vmatpush.bf16.msra.mxu0 %v763
        %963 = vmatpush.bf16.msra.mxu0 %v755
        %964 = vmatpush.bf16.msra.mxu0 %v747
        %965 = vmatpush.bf16.msra.mxu0 %v739
        %966 = vmatmul.bf16.gmra.mxu0 %v457
        %v967 = vpop.f32.mrf.mxu0
        %v968 = vadd.f32 %v531, %v967
        %v969 = vpop.f32.mrf.mxu0
        %v970 = vadd.f32 %v531, %v969
        %971 = vdwg.mxu0
        %v972 = vmax.f32 %v870, 0.0
        %v973 = vmax.f32 %v884, 0.0
        %v974 = vmax.f32 %v898, 0.0
        %v975 = vmax.f32 %v912, 0.0
        %v976 = vmax.f32 %v926, 0.0
        %v977 = vmax.f32 %v940, 0.0
        %v978 = vmax.f32 %v954, 0.0
        %v979 = vmax.f32 %v968, 0.0
        %v980 = vmax.f32 %v872, 0.0
        %v981 = vmax.f32 %v886, 0.0
        %v982 = vmax.f32 %v900, 0.0
        %v983 = vmax.f32 %v914, 0.0
        %v984 = vmax.f32 %v928, 0.0
        %v985 = vmax.f32 %v942, 0.0
        %v986 = vmax.f32 %v956, 0.0
        %v987 = vmax.f32 %v970, 0.0
        %v988 = vmax.f32 %v972, %v980
        %v989 = vrot.slane %v988, 4
        %v990 = vmax.f32 %v988, %v989
        %v991 = vrot.slane %v990, 2
        %v992 = vmax.f32 %v990, %v991
        %v993 = vrot.slane %v992, 1
        %v994 = vmax.f32 %v992, %v993
        %v995 = vmax.f32 %v973, %v981
        %v996 = vrot.slane %v995, 4
        %v997 = vmax.f32 %v995, %v996
        %v998 = vrot.slane %v997, 2
        %v999 = vmax.f32 %v997, %v998
        %v1000 = vrot.slane %v999, 1
        %v1001 = vmax.f32 %v999, %v1000
        %v1002 = vmax.f32 %v974, %v982
        %v1003 = vrot.slane %v1002, 4
        %v1004 = vmax.f32 %v1002, %v1003
        %v1005 = vrot.slane %v1004, 2
        %v1006 = vmax.f32 %v1004, %v1005
        %v1007 = vrot.slane %v1006, 1
        %v1008 = vmax.f32 %v1006, %v1007
        %v1009 = vmax.f32 %v975, %v983
        %v1010 = vrot.slane %v1009, 4
        %v1011 = vmax.f32 %v1009, %v1010
        %v1012 = vrot.slane %v1011, 2
        %v1013 = vmax.f32 %v1011, %v1012
        %v1014 = vrot.slane %v1013, 1
        %v1015 = vmax.f32 %v1013, %v1014
        %v1016 = vmax.f32 %v976, %v984
        %v1017 = vrot.slane %v1016, 4
        %v1018 = vmax.f32 %v1016, %v1017
        %v1019 = vrot.slane %v1018, 2
        %v1020 = vmax.f32 %v1018, %v1019
        %v1021 = vrot.slane %v1020, 1
        %v1022 = vmax.f32 %v1020, %v1021
        %v1023 = vmax.f32 %v977, %v985
        %v1024 = vrot.slane %v1023, 4
        %v1025 = vmax.f32 %v1023, %v1024
        %v1026 = vrot.slane %v1025, 2
        %v1027 = vmax.f32 %v1025, %v1026
        %v1028 = vrot.slane %v1027, 1
        %v1029 = vmax.f32 %v1027, %v1028
        %v1030 = vmax.f32 %v978, %v986
        %v1031 = vrot.slane %v1030, 4
        %v1032 = vmax.f32 %v1030, %v1031
        %v1033 = vrot.slane %v1032, 2
        %v1034 = vmax.f32 %v1032, %v1033
        %v1035 = vrot.slane %v1034, 1
        %v1036 = vmax.f32 %v1034, %v1035
        %v1037 = vmax.f32 %v979, %v987
        %v1038 = vrot.slane %v1037, 4
        %v1039 = vmax.f32 %v1037, %v1038
        %v1040 = vrot.slane %v1039, 2
        %v1041 = vmax.f32 %v1039, %v1040
        %v1042 = vrot.slane %v1041, 1
        %v1043 = vmax.f32 %v1041, %v1042
        %p1044 = scmp.eq.s32.totalorder %s25, 0
        // Predicated region
        $region61: #{pointnetfeat_forward.2} parent=47 // pred_check
          %p1045 = pneg %p1044
        $region62: #{pointnetfeat_forward.2} parent=47 // pred_check_branch
          %1047 = sbr.rel (%p1045) target = $region64
        $region63: #{pointnetfeat_forward.2} parent=47 // pred_region
          %v1056 = vrot.slane %v1001, 7
          %v1057 = vrot.slane %v1008, 6
          %v1058 = vrot.slane %v1015, 5
          %v1059 = vrot.slane %v1022, 4
          %v1060 = vrot.slane %v1029, 3
          %v1061 = vrot.slane %v1036, 2
          %v1062 = vrot.slane %v1043, 1
          %vm1063 = vcmask 1040384
          %v1064 = vsel %vm1063, %v994, %v1056
          %vm1065 = vcmask 1042434
          %v1066 = vsel %vm1065, %v1057, %v1058
          %vm1067 = vcmask 1041408
          %v1068 = vsel %vm1067, %v1064, %v1066
          %vm1069 = vcmask 1044484
          %v1070 = vsel %vm1069, %v1059, %v1060
          %vm1071 = vcmask 1046534
          %v1072 = vsel %vm1071, %v1061, %v1062
          %vm1073 = vcmask 1045508
          %v1074 = vsel %vm1073, %v1070, %v1072
          %vm1075 = vcmask 1043456
          %v1076 = vsel %vm1075, %v1068, %v1074
          %1078 = vst [vmem:[%s348] sm:$0xff] %v1076
        $region64: #{pointnetfeat_forward.2} parent=47 // pred_fallthru
          _
        %p1079 = scmp.gt.s32.totalorder %s25, 0
        // Predicated region
        $region65: #{pointnetfeat_forward.2} parent=47 // pred_check
          %p1080 = pneg %p1079
        $region66: #{pointnetfeat_forward.2} parent=47 // pred_check_branch
          %1082 = sbr.rel (%p1080) target = $region68
        $region67: #{pointnetfeat_forward.2} parent=47 // pred_region
          %v1083 = vld [vmem:[%s348] sm:$0xff]
          %v1092 = vrot.slane %v1001, 7
          %v1093 = vrot.slane %v1008, 6
          %v1094 = vrot.slane %v1015, 5
          %v1095 = vrot.slane %v1022, 4
          %v1096 = vrot.slane %v1029, 3
          %v1097 = vrot.slane %v1036, 2
          %v1098 = vrot.slane %v1043, 1
          %vm1099 = vcmask 1040384
          %v1100 = vsel %vm1099, %v994, %v1092
          %vm1101 = vcmask 1042434
          %v1102 = vsel %vm1101, %v1093, %v1094
          %vm1103 = vcmask 1041408
          %v1104 = vsel %vm1103, %v1100, %v1102
          %vm1105 = vcmask 1044484
          %v1106 = vsel %vm1105, %v1095, %v1096
          %vm1107 = vcmask 1046534
          %v1108 = vsel %vm1107, %v1097, %v1098
          %vm1109 = vcmask 1045508
          %v1110 = vsel %vm1109, %v1106, %v1108
          %vm1111 = vcmask 1043456
          %v1112 = vsel %vm1111, %v1104, %v1110
          %v1114 = vmax.f32 %v1083, %v1112
          %1115 = vst [vmem:[%s348] sm:$0xff] %v1114
        $region68: #{pointnetfeat_forward.2} parent=47 // pred_fallthru
          _
        %p1116 = scmp.lt.s32.totalorder %s24, 1
        %s1117 = scalar_select %p1116, %s24, 1
        %s1118 = smul.addr %s1117, 8
        %s1119 = scalar_lea.vmem %s7, %s1118
        // Predicated region
        $region69: #{pointnetfeat_forward.2} parent=47 // pred_check
          %p1120 = pneg %p204
        $region70: #{pointnetfeat_forward.2} parent=47 // pred_check_branch
          %1122 = sbr.rel (%p1120) target = $region72
        $region71: #{pointnetfeat_forward.2} parent=47 // pred_region
          _
        $region72: #{pointnetfeat_forward.2} parent=47 // pred_fallthru
          _
      $region48: #{pointnetfeat_forward.2} parent=5 // pred_fallthru
        _
      %p1123 = scmp.le.s32.totalorder 2, %s15
      // Predicated region
      $region73: #{pointnetfeat_forward.2} parent=5 // pred_check
        %p1124 = pneg %p1123
      $region74: #{pointnetfeat_forward.2} parent=5 // pred_check_branch
        %1126 = sbr.rel (%p1124) target = $region76
      $region75: #{pointnetfeat_forward.2} parent=5 // pred_region
        %s1127 = ssub.s32 %s15, 2
        // Predicated region
        $region77: #{pointnetfeat_forward.2} parent=75 // pred_check
          %p1128 = pneg %p210
        $region78: #{pointnetfeat_forward.2} parent=75 // pred_check_branch
          %1130 = sbr.rel (%p1128) target = $region80
        $region79: #{pointnetfeat_forward.2} parent=75 // pred_region
          %p1131 = scmp.lt.s32.totalorder %s26, 1
          %s1132 = scalar_select %p1131, %s26, 1
          %s1133 = smul.addr %s1132, 8
          %s1134 = scalar_lea.vmem %s7, %s1133
        $region80: #{pointnetfeat_forward.2} parent=75 // pred_fallthru
          _
      $region76: #{pointnetfeat_forward.2} parent=5 // pred_fallthru
        _
    $region6: #{pointnetfeat_forward.2} parent=1 // loop_footer
      %s19 = sadd.s32 1, %s15
    $region7: #{pointnetfeat_forward.2} parent=1 // loop_footer_branch
      %14 = sbr.rel target = $region3
    $region8: #{pointnetfeat_forward.2} parent=1 // loop_exit
      _
    %1135 = vsyncpa [#allocation3], 1
    %s1136 = scalar_lea.sflag [#allocation3], 1
    %1137 = vsyncpa %s1136, 1
    %1138 = vsyncpa [#allocation5], 1

// kernel: pointnetfeat_forward.3
$region0: #{pointnetfeat_forward.3}
  #allocation0 [shape = 'u32[]', space=smem, size = 0x4, offset = 0x4, fixed_abs, tag = 'smem constant byte address 0x4 - core index']
  #allocation1 [shape = 'u32[72,128]{1,0:T(1,128)}', space=vmem, size = 0x9000, scoped, tag = 'internal scratch']
  %s0 = inlined_call_operand.vmem [shape: f32[2,16,3], index: 0, kind: input, shape index: {}]
  %s1 = inlined_call_operand.vmem [shape: f32[2,3,64], index: 1, kind: input, shape index: {}]
  %s2 = inlined_call_operand.vmem [shape: bf16[64,128], index: 2, kind: input, shape index: {}]
  %s3 = inlined_call_operand.vmem [shape: bf16[128,1024], index: 3, kind: input, shape index: {}]
  %s4 = inlined_call_operand.vmem [shape: f32[1,64], index: 4, kind: input, shape index: {}]
  %s5 = inlined_call_operand.vmem [shape: f32[1,128], index: 5, kind: input, shape index: {}]
  %s6 = inlined_call_operand.vmem [shape: f32[1,1024], index: 6, kind: input, shape index: {}]
  %s7 = inlined_call_operand.vmem [shape: f32[2,1,1024], index: 7, kind: output, shape index: {}]
  %s8 = sld [smem:[#allocation0]]
  $region69: #{pointnetfeat_forward.3} parent=0
    _
  %s10 = ssub.s32 1, %s8
  %s11 = scalar_select 0, %s10, %s8
  loop: start=0, step=1, limit=4
  $region2: #{pointnetfeat_forward.3} parent=0 // loop_pre_header
    _
  $region3: #{pointnetfeat_forward.3} parent=0 // loop_header
    %s13 = sphi 0, %s17
    %p14 = scmp.ge.s32.totalorder %s13, 4
    %s20 = sphi 0, %s32
    %s21 = sphi 0, %s28
    %s22 = sphi 0, %s20
    %s23 = sphi 0, %s21
    %s24 = sphi 0, %s22
    %s25 = sphi 0, %s23
    %s37 = sphi 0, %s39
    %s40 = sphi 0, %s37
    %s41 = sphi 0, %s40
    %s57 = sphi 0, %s41
    %s63 = sphi 0, %s65
    %s66 = sphi 0, %s63
    %s67 = sphi 0, %s66
    %s83 = sphi 0, %s67
    %s87 = sphi 0, %s87
    %s89 = sphi 0, %s87
    %s90 = sphi 0, %s89
    %s104 = sphi 0, %s90
    %s108 = sphi 0, %s108
    %s110 = sphi 0, %s108
    %s111 = sphi 0, %s110
    %s125 = sphi 0, %s111
    %s129 = sphi 0, %s129
    %s131 = sphi 0, %s129
    %s132 = sphi 0, %s131
    %s146 = sphi 0, %s132
    %s150 = sphi 0, %s150
    %s152 = sphi 0, %s150
    %s153 = sphi 0, %s152
    %s167 = sphi 0, %s153
    %s171 = sphi 0, %s171
    %s173 = sphi 0, %s171
    %s174 = sphi 0, %s173
    %s188 = sphi 0, %s174
    %s194 = sphi 0, %s196
    %s197 = sphi 0, %s194
    %s198 = sphi 0, %s197
    %s214 = sphi 0, %s198
  $region4: #{pointnetfeat_forward.3} parent=0 // loop_header_branch
    %16 = sbr.rel (%p14) target = $region8
  $region5: #{pointnetfeat_forward.3} parent=0 // loop_body
    %s18 = ssub.s32 %s13, 1
    %s19 = ssub.s32 %s13, 2
    %s26 = sadd.s32 1, %s21
    %p27 = scmp.ge.s32.totalorder %s26, 1
    %s28 = scalar_select %p27, 0, %s26
    %s29 = sadd.s32 1, %s20
    %s30 = scalar_select %p27, %s29, %s20
    %p31 = scmp.ge.s32.totalorder %s30, 2
    %s32 = scalar_select %p31, 0, %s30
    %s33 = ssub.s32 %s20, %s32
    %s34 = ssub.s32 %s21, %s28
    %s35 = sor.u32 %s33, %s34
    %p36 = scmp.eq.s32.totalorder %s35, 0
    %s38 = sadd.s32 %s37, 1
    %s39 = scalar_select %p36, %s37, %s38
    %p42 = pneg %p36
    %p43 = scmp.eq.s32.totalorder %s13, 1
    %p44 = por %p42, %p43
    %p45 = scmp.ne.s32.totalorder %s37, %s40
    %p46 = scmp.eq.s32.totalorder %s13, 0
    %p47 = por %p45, %p46
    %p48 = scmp.ne.s32.totalorder %s37, %s40
    %p49 = scmp.eq.s32.totalorder %s18, 1
    %p50 = por %p48, %p49
    %p51 = scmp.ne.s32.totalorder %s40, %s41
    %p52 = scmp.eq.s32.totalorder %s18, 0
    %p53 = por %p51, %p52
    %p54 = scmp.ne.s32.totalorder %s40, %s41
    %p55 = scmp.eq.s32.totalorder %s19, 1
    %p56 = por %p54, %p55
    %p58 = scmp.ne.s32.totalorder %s41, %s57
    %p59 = scmp.eq.s32.totalorder %s19, 0
    %p60 = por %p58, %p59
    %s61 = ssub.s32 %s20, %s32
    %p62 = scmp.eq.s32.totalorder %s61, 0
    %s64 = sadd.s32 %s63, 1
    %s65 = scalar_select %p62, %s63, %s64
    %p68 = pneg %p62
    %p69 = scmp.eq.s32.totalorder %s13, 1
    %p70 = por %p68, %p69
    %p71 = scmp.ne.s32.totalorder %s63, %s66
    %p72 = scmp.eq.s32.totalorder %s13, 0
    %p73 = por %p71, %p72
    %p74 = scmp.ne.s32.totalorder %s63, %s66
    %p75 = scmp.eq.s32.totalorder %s18, 1
    %p76 = por %p74, %p75
    %p77 = scmp.ne.s32.totalorder %s66, %s67
    %p78 = scmp.eq.s32.totalorder %s18, 0
    %p79 = por %p77, %p78
    %p80 = scmp.ne.s32.totalorder %s66, %s67
    %p81 = scmp.eq.s32.totalorder %s19, 1
    %p82 = por %p80, %p81
    %p84 = scmp.ne.s32.totalorder %s67, %s83
    %p85 = scmp.eq.s32.totalorder %s19, 0
    %p86 = por %p84, %p85
    %s88 = sadd.s32 %s87, 1
    %p91 = scmp.eq.s32.totalorder %s13, 1
    %p92 = scmp.ne.s32.totalorder %s87, %s89
    %p93 = scmp.eq.s32.totalorder %s13, 0
    %p94 = por %p92, %p93
    %p95 = scmp.ne.s32.totalorder %s87, %s89
    %p96 = scmp.eq.s32.totalorder %s18, 1
    %p97 = por %p95, %p96
    %p98 = scmp.ne.s32.totalorder %s89, %s90
    %p99 = scmp.eq.s32.totalorder %s18, 0
    %p100 = por %p98, %p99
    %p101 = scmp.ne.s32.totalorder %s89, %s90
    %p102 = scmp.eq.s32.totalorder %s19, 1
    %p103 = por %p101, %p102
    %p105 = scmp.ne.s32.totalorder %s90, %s104
    %p106 = scmp.eq.s32.totalorder %s19, 0
    %p107 = por %p105, %p106
    %s109 = sadd.s32 %s108, 1
    %p112 = scmp.eq.s32.totalorder %s13, 1
    %p113 = scmp.ne.s32.totalorder %s108, %s110
    %p114 = scmp.eq.s32.totalorder %s13, 0
    %p115 = por %p113, %p114
    %p116 = scmp.ne.s32.totalorder %s108, %s110
    %p117 = scmp.eq.s32.totalorder %s18, 1
    %p118 = por %p116, %p117
    %p119 = scmp.ne.s32.totalorder %s110, %s111
    %p120 = scmp.eq.s32.totalorder %s18, 0
    %p121 = por %p119, %p120
    %p122 = scmp.ne.s32.totalorder %s110, %s111
    %p123 = scmp.eq.s32.totalorder %s19, 1
    %p124 = por %p122, %p123
    %p126 = scmp.ne.s32.totalorder %s111, %s125
    %p127 = scmp.eq.s32.totalorder %s19, 0
    %p128 = por %p126, %p127
    %s130 = sadd.s32 %s129, 1
    %p133 = scmp.eq.s32.totalorder %s13, 1
    %p134 = scmp.ne.s32.totalorder %s129, %s131
    %p135 = scmp.eq.s32.totalorder %s13, 0
    %p136 = por %p134, %p135
    %p137 = scmp.ne.s32.totalorder %s129, %s131
    %p138 = scmp.eq.s32.totalorder %s18, 1
    %p139 = por %p137, %p138
    %p140 = scmp.ne.s32.totalorder %s131, %s132
    %p141 = scmp.eq.s32.totalorder %s18, 0
    %p142 = por %p140, %p141
    %p143 = scmp.ne.s32.totalorder %s131, %s132
    %p144 = scmp.eq.s32.totalorder %s19, 1
    %p145 = por %p143, %p144
    %p147 = scmp.ne.s32.totalorder %s132, %s146
    %p148 = scmp.eq.s32.totalorder %s19, 0
    %p149 = por %p147, %p148
    %s151 = sadd.s32 %s150, 1
    %p154 = scmp.eq.s32.totalorder %s13, 1
    %p155 = scmp.ne.s32.totalorder %s150, %s152
    %p156 = scmp.eq.s32.totalorder %s13, 0
    %p157 = por %p155, %p156
    %p158 = scmp.ne.s32.totalorder %s150, %s152
    %p159 = scmp.eq.s32.totalorder %s18, 1
    %p160 = por %p158, %p159
    %p161 = scmp.ne.s32.totalorder %s152, %s153
    %p162 = scmp.eq.s32.totalorder %s18, 0
    %p163 = por %p161, %p162
    %p164 = scmp.ne.s32.totalorder %s152, %s153
    %p165 = scmp.eq.s32.totalorder %s19, 1
    %p166 = por %p164, %p165
    %p168 = scmp.ne.s32.totalorder %s153, %s167
    %p169 = scmp.eq.s32.totalorder %s19, 0
    %p170 = por %p168, %p169
    %s172 = sadd.s32 %s171, 1
    %p175 = scmp.eq.s32.totalorder %s13, 1
    %p176 = scmp.ne.s32.totalorder %s171, %s173
    %p177 = scmp.eq.s32.totalorder %s13, 0
    %p178 = por %p176, %p177
    %p179 = scmp.ne.s32.totalorder %s171, %s173
    %p180 = scmp.eq.s32.totalorder %s18, 1
    %p181 = por %p179, %p180
    %p182 = scmp.ne.s32.totalorder %s173, %s174
    %p183 = scmp.eq.s32.totalorder %s18, 0
    %p184 = por %p182, %p183
    %p185 = scmp.ne.s32.totalorder %s173, %s174
    %p186 = scmp.eq.s32.totalorder %s19, 1
    %p187 = por %p185, %p186
    %p189 = scmp.ne.s32.totalorder %s174, %s188
    %p190 = scmp.eq.s32.totalorder %s19, 0
    %p191 = por %p189, %p190
    %s192 = ssub.s32 %s20, %s32
    %p193 = scmp.eq.s32.totalorder %s192, 0
    %s195 = sadd.s32 %s194, 1
    %s196 = scalar_select %p193, %s194, %s195
    %p199 = pneg %p193
    %p200 = scmp.eq.s32.totalorder %s13, 1
    %p201 = por %p199, %p200
    %p202 = scmp.ne.s32.totalorder %s194, %s197
    %p203 = scmp.eq.s32.totalorder %s13, 0
    %p204 = por %p202, %p203
    %p205 = scmp.ne.s32.totalorder %s194, %s197
    %p206 = scmp.eq.s32.totalorder %s18, 1
    %p207 = por %p205, %p206
    %p208 = scmp.ne.s32.totalorder %s197, %s198
    %p209 = scmp.eq.s32.totalorder %s18, 0
    %p210 = por %p208, %p209
    %p211 = scmp.ne.s32.totalorder %s197, %s198
    %p212 = scmp.eq.s32.totalorder %s19, 1
    %p213 = por %p211, %p212
    %p215 = scmp.ne.s32.totalorder %s198, %s214
    %p216 = scmp.eq.s32.totalorder %s19, 0
    %p217 = por %p215, %p216
    %p218 = scmp.le.s32.totalorder 1, %s13
    %p219 = scmp.lt.s32.totalorder %s13, 3
    %p220 = pnand %p218, %p219
    %p221 = pneg %p220
    // Predicated region
    $region9: #{pointnetfeat_forward.3} parent=5 // pred_check
      _
    $region10: #{pointnetfeat_forward.3} parent=5 // pred_check_branch
      %223 = sbr.rel (%p220) target = $region12
    $region11: #{pointnetfeat_forward.3} parent=5 // pred_region
      %s224 = ssub.s32 %s13, 1
      // Predicated region
      $region13: #{pointnetfeat_forward.3} parent=11 // pred_check
        %p225 = pneg %p100
      $region14: #{pointnetfeat_forward.3} parent=11 // pred_check_branch
        %227 = sbr.rel (%p225) target = $region16
      $region15: #{pointnetfeat_forward.3} parent=11 // pred_region
        _
      $region16: #{pointnetfeat_forward.3} parent=11 // pred_fallthru
        _
      // Predicated region
      $region17: #{pointnetfeat_forward.3} parent=11 // pred_check
        %p228 = pneg %p121
      $region18: #{pointnetfeat_forward.3} parent=11 // pred_check_branch
        %230 = sbr.rel (%p228) target = $region20
      $region19: #{pointnetfeat_forward.3} parent=11 // pred_region
        _
      $region20: #{pointnetfeat_forward.3} parent=11 // pred_fallthru
        _
      // Predicated region
      $region21: #{pointnetfeat_forward.3} parent=11 // pred_check
        %p231 = pneg %p142
      $region22: #{pointnetfeat_forward.3} parent=11 // pred_check_branch
        %233 = sbr.rel (%p231) target = $region24
      $region23: #{pointnetfeat_forward.3} parent=11 // pred_region
        _
      $region24: #{pointnetfeat_forward.3} parent=11 // pred_fallthru
        _
      // Predicated region
      $region25: #{pointnetfeat_forward.3} parent=11 // pred_check
        %p234 = pneg %p163
      $region26: #{pointnetfeat_forward.3} parent=11 // pred_check_branch
        %236 = sbr.rel (%p234) target = $region28
      $region27: #{pointnetfeat_forward.3} parent=11 // pred_region
        _
      $region28: #{pointnetfeat_forward.3} parent=11 // pred_fallthru
        _
      // Predicated region
      $region29: #{pointnetfeat_forward.3} parent=11 // pred_check
        %p237 = pneg %p184
      $region30: #{pointnetfeat_forward.3} parent=11 // pred_check_branch
        %239 = sbr.rel (%p237) target = $region32
      $region31: #{pointnetfeat_forward.3} parent=11 // pred_region
        _
      $region32: #{pointnetfeat_forward.3} parent=11 // pred_fallthru
        _
    $region12: #{pointnetfeat_forward.3} parent=5 // pred_fallthru
      _
    %p240 = scmp.lt.s32.totalorder %s13, 2
    // Predicated region
    $region33: #{pointnetfeat_forward.3} parent=5 // pred_check
      %p241 = pneg %p240
    $region34: #{pointnetfeat_forward.3} parent=5 // pred_check_branch
      %243 = sbr.rel (%p241) target = $region36
    $region35: #{pointnetfeat_forward.3} parent=5 // pred_region
      // Predicated region
      $region37: #{pointnetfeat_forward.3} parent=35 // pred_check
        %p244 = pneg %p47
      $region38: #{pointnetfeat_forward.3} parent=35 // pred_check_branch
        %246 = sbr.rel (%p244) target = $region40
      $region39: #{pointnetfeat_forward.3} parent=35 // pred_region
        %s247 = smul.u32 2, %s21
        %p248 = scmp.lt.s32.totalorder %s20, 1
        %s249 = scalar_select %p248, %s20, 1
        %p250 = scmp.lt.s32.totalorder %s247, 1
        %s251 = scalar_select %p250, %s247, 1
        %s252 = smul.addr %s249, 2
        %s253 = sadd.s32 %s251, %s252
        %s254 = smul.addr %s253, 8
        %s255 = scalar_lea.vmem %s0, %s254
        %s256 = smul.u32 2, %s21
      $region40: #{pointnetfeat_forward.3} parent=35 // pred_fallthru
        _
      // Predicated region
      $region41: #{pointnetfeat_forward.3} parent=35 // pred_check
        %p257 = pneg %p73
      $region42: #{pointnetfeat_forward.3} parent=35 // pred_check_branch
        %259 = sbr.rel (%p257) target = $region44
      $region43: #{pointnetfeat_forward.3} parent=35 // pred_region
        %p260 = scmp.lt.s32.totalorder %s20, 1
        %s261 = scalar_select %p260, %s20, 1
        %s262 = smul.addr %s261, 4
        %s263 = scalar_lea.vmem %s1, %s262
      $region44: #{pointnetfeat_forward.3} parent=35 // pred_fallthru
        _
    $region36: #{pointnetfeat_forward.3} parent=5 // pred_fallthru
      _
    %p264 = scmp.le.s32.totalorder 1, %s13
    %p265 = scmp.lt.s32.totalorder %s13, 3
    %p266 = pnand %p264, %p265
    %p267 = pneg %p266
    // Predicated region
    $region45: #{pointnetfeat_forward.3} parent=5 // pred_check
      _
    $region46: #{pointnetfeat_forward.3} parent=5 // pred_check_branch
      %269 = sbr.rel (%p266) target = $region48
    $region47: #{pointnetfeat_forward.3} parent=5 // pred_region
      %s270 = ssub.s32 %s13, 1
      %s271 = smul.u32 2, %s23
      %p272 = scmp.lt.s32.totalorder %s22, 1
      %s273 = scalar_select %p272, %s22, 1
      %p274 = scmp.lt.s32.totalorder %s271, 1
      %s275 = scalar_select %p274, %s271, 1
      %s276 = smul.addr %s273, 2
      %s277 = sadd.s32 %s275, %s276
      %s278 = smul.addr %s277, 8
      %s279 = scalar_lea.vmem %s0, %s278
      %p280 = pneg %p53
      %p281 = pneg %p50
      %p282 = scmp.lt.s32.totalorder %s22, 1
      %s283 = scalar_select %p282, %s22, 1
      %s284 = smul.addr %s283, 4
      %s285 = scalar_lea.vmem %s1, %s284
      %p286 = pneg %p79
      %p287 = pneg %p76
      %p288 = pneg %p100
      %p289 = pneg %p97
      %p290 = pneg %p121
      %p291 = pneg %p118
      %p292 = pneg %p142
      %p293 = pneg %p139
      %p294 = pneg %p163
      %p295 = pneg %p160
      %p296 = pneg %p184
      %p297 = pneg %p181
      %p298 = pneg %p210
      %p299 = pneg %p207
      %p300 = scmp.lt.s32.totalorder %s22, 1
      %s301 = scalar_select %p300, %s22, 1
      %s302 = smul.addr %s301, 8
      %s303 = scalar_lea.vmem %s7, %s302
      %s304 = smul.u32 2, %s23
      %p305 = scmp.lt.s32.totalorder %s22, 1
      %s306 = scalar_select %p305, %s22, 1
      %p307 = scmp.lt.s32.totalorder %s304, 1
      %s308 = scalar_select %p307, %s304, 1
      %s309 = smul.addr %s306, 2
      %s310 = sadd.s32 %s308, %s309
      %s311 = smul.addr %s310, 8
      %s312 = scalar_lea.vmem %s0, %s311
      %s313 = smul.u32 2, %s23
      %p314 = scmp.lt.s32.totalorder %s22, 1
      %s315 = scalar_select %p314, %s22, 1
      %s316 = smul.addr %s315, 4
      %s317 = scalar_lea.vmem %s1, %s316
      %p318 = scmp.lt.s32.totalorder %s22, 1
      %s319 = scalar_select %p318, %s22, 1
      %s320 = smul.addr %s319, 8
      %s321 = scalar_lea.vmem %s7, %s320
      %v323 = vld [vmem:[%s312] sm:$0xff]
      %v324 = vld [vmem:[%s312 + $0x8] sm:$0xff]
      %v325 = vld [vmem:[%s317] sm:$0x7]
      %327 = vset.pattern.permute.xlu0 0
      %328 = vperm.xlu0 %327, %v323
      %v329 = vpop.permute.xlu0 %328
      %332 = vset.pattern.permute.xlu0 0
      %333 = vperm.xlu0 %332, %v324
      %v334 = vpop.permute.xlu0 %333
      %v336 = vperm.slane %v325, 0
      %v337 = vmul.f32 %v329, %v336
      %v338 = vmul.f32 %v334, %v336
      %339 = vset.pattern.permute.xlu0 1
      %340 = vperm.xlu0 %339, %v323
      %v341 = vpop.permute.xlu0 %340
      %343 = vset.pattern.permute.xlu0 1
      %344 = vperm.xlu0 %343, %v324
      %v345 = vpop.permute.xlu0 %344
      %v347 = vperm.slane %v325, 1
      %v348 = vmul.f32 %v341, %v347
      %v349 = vmul.f32 %v345, %v347
      %v350 = vadd.f32 %v337, %v348
      %v351 = vadd.f32 %v338, %v349
      %352 = vset.pattern.permute.xlu0 2
      %353 = vperm.xlu0 %352, %v323
      %v354 = vpop.permute.xlu0 %353
      %356 = vset.pattern.permute.xlu0 2
      %357 = vperm.xlu0 %356, %v324
      %v358 = vpop.permute.xlu0 %357
      %v360 = vperm.slane %v325, 2
      %v361 = vmul.f32 %v354, %v360
      %v362 = vmul.f32 %v358, %v360
      %v363 = vadd.f32 %v350, %v361
      %v364 = vadd.f32 %v351, %v362
      %v365 = vld [vmem:[%s4] sm:$0x1]
      %v367 = vperm.slane %v365, 0
      %v369 = vadd.f32 %v363, %v367
      %v370 = vadd.f32 %v364, %v367
      %v371 = vmax.f32 %v369, 0.0
      %v372 = vmax.f32 %v370, 0.0
      %v373 = vpack.c.bf16 %v372, %v371
      %v374 = vld [vmem:[%s2] sm:$0xf]
      %v375 = vld [vmem:[%s2 + $0x4] sm:$0xf]
      %v376 = vld [vmem:[%s2 + $0x8] sm:$0xf]
      %v377 = vld [vmem:[%s2 + $0xc] sm:$0xf]
      %v378 = vld [vmem:[%s2 + $0x10] sm:$0xf]
      %v379 = vld [vmem:[%s2 + $0x14] sm:$0xf]
      %v380 = vld [vmem:[%s2 + $0x18] sm:$0xf]
      %v381 = vld [vmem:[%s2 + $0x1c] sm:$0xf]
      %v382 = vld [vmem:[%s5] sm:$0x1]
      %v384 = vperm.slane %v382, 0
      %v394 = vunpack.c.l.b16 %v374
      %v395 = vunpack.c.l.b16 %v375
      %v396 = vunpack.c.l.b16 %v376
      %v397 = vunpack.c.l.b16 %v377
      %v398 = vunpack.c.l.b16 %v378
      %v399 = vunpack.c.l.b16 %v379
      %v400 = vunpack.c.l.b16 %v380
      %v401 = vunpack.c.l.b16 %v381
      %v402 = vpack.c.b16 %v395, %v394
      %v403 = vpack.c.b16 %v397, %v396
      %v404 = vpack.c.b16 %v399, %v398
      %v405 = vpack.c.b16 %v401, %v400
      %vm410 = vcmask 523264
      %v412 = vsel %vm410, %v373, 0
      %414 = vmatpush.bf16.msra.mxu0 0
      %415 = vmatpush.bf16.msra.mxu0 0
      %416 = vmatpush.bf16.msra.mxu0 0
      %417 = vmatpush.bf16.msra.mxu0 0
      %418 = vmatpush.bf16.msra.mxu0 %v405
      %419 = vmatpush.bf16.msra.mxu0 %v404
      %420 = vmatpush.bf16.msra.mxu0 %v403
      %421 = vmatpush.bf16.msra.mxu0 %v402
      %422 = vmatmul.bf16.gmra.mxu0 %v412
      %v423 = vpop.f32.mrf.mxu0
      %v424 = vadd.f32 %v384, %v423
      %v425 = vpop.f32.mrf.mxu0
      %v426 = vadd.f32 %v384, %v425
      %427 = vdwg.mxu0
      %v428 = vmax.f32 %v424, 0.0
      %v429 = vmax.f32 %v426, 0.0
      %v430 = vpack.c.bf16 %v429, %v428
      %v431 = vld [vmem:[%s3] sm:$0xff]
      %v432 = vld [vmem:[%s3 + $0x8] sm:$0xff]
      %v433 = vld [vmem:[%s3 + $0x10] sm:$0xff]
      %v434 = vld [vmem:[%s3 + $0x18] sm:$0xff]
      %v435 = vld [vmem:[%s3 + $0x20] sm:$0xff]
      %v436 = vld [vmem:[%s3 + $0x28] sm:$0xff]
      %v437 = vld [vmem:[%s3 + $0x30] sm:$0xff]
      %v438 = vld [vmem:[%s3 + $0x38] sm:$0xff]
      %v439 = vld [vmem:[%s3 + $0x40] sm:$0xff]
      %v440 = vld [vmem:[%s3 + $0x48] sm:$0xff]
      %v441 = vld [vmem:[%s3 + $0x50] sm:$0xff]
      %v442 = vld [vmem:[%s3 + $0x58] sm:$0xff]
      %v443 = vld [vmem:[%s3 + $0x60] sm:$0xff]
      %v444 = vld [vmem:[%s3 + $0x68] sm:$0xff]
      %v445 = vld [vmem:[%s3 + $0x70] sm:$0xff]
      %v446 = vld [vmem:[%s3 + $0x78] sm:$0xff]
      %v447 = vld [vmem:[%s3 + $0x80] sm:$0xff]
      %v448 = vld [vmem:[%s3 + $0x88] sm:$0xff]
      %v449 = vld [vmem:[%s3 + $0x90] sm:$0xff]
      %v450 = vld [vmem:[%s3 + $0x98] sm:$0xff]
      %v451 = vld [vmem:[%s3 + $0xa0] sm:$0xff]
      %v452 = vld [vmem:[%s3 + $0xa8] sm:$0xff]
      %v453 = vld [vmem:[%s3 + $0xb0] sm:$0xff]
      %v454 = vld [vmem:[%s3 + $0xb8] sm:$0xff]
      %v455 = vld [vmem:[%s3 + $0xc0] sm:$0xff]
      %v456 = vld [vmem:[%s3 + $0xc8] sm:$0xff]
      %v457 = vld [vmem:[%s3 + $0xd0] sm:$0xff]
      %v458 = vld [vmem:[%s3 + $0xd8] sm:$0xff]
      %v459 = vld [vmem:[%s3 + $0xe0] sm:$0xff]
      %v460 = vld [vmem:[%s3 + $0xe8] sm:$0xff]
      %v461 = vld [vmem:[%s3 + $0xf0] sm:$0xff]
      %v462 = vld [vmem:[%s3 + $0xf8] sm:$0xff]
      %v463 = vld [vmem:[%s3 + $0x100] sm:$0xff]
      %v464 = vld [vmem:[%s3 + $0x108] sm:$0xff]
      %v465 = vld [vmem:[%s3 + $0x110] sm:$0xff]
      %v466 = vld [vmem:[%s3 + $0x118] sm:$0xff]
      %v467 = vld [vmem:[%s3 + $0x120] sm:$0xff]
      %v468 = vld [vmem:[%s3 + $0x128] sm:$0xff]
      %v469 = vld [vmem:[%s3 + $0x130] sm:$0xff]
      %v470 = vld [vmem:[%s3 + $0x138] sm:$0xff]
      %v471 = vld [vmem:[%s3 + $0x140] sm:$0xff]
      %v472 = vld [vmem:[%s3 + $0x148] sm:$0xff]
      %v473 = vld [vmem:[%s3 + $0x150] sm:$0xff]
      %v474 = vld [vmem:[%s3 + $0x158] sm:$0xff]
      %v475 = vld [vmem:[%s3 + $0x160] sm:$0xff]
      %v476 = vld [vmem:[%s3 + $0x168] sm:$0xff]
      %v477 = vld [vmem:[%s3 + $0x170] sm:$0xff]
      %v478 = vld [vmem:[%s3 + $0x178] sm:$0xff]
      %v479 = vld [vmem:[%s3 + $0x180] sm:$0xff]
      %v480 = vld [vmem:[%s3 + $0x188] sm:$0xff]
      %v481 = vld [vmem:[%s3 + $0x190] sm:$0xff]
      %v482 = vld [vmem:[%s3 + $0x198] sm:$0xff]
      %v483 = vld [vmem:[%s3 + $0x1a0] sm:$0xff]
      %v484 = vld [vmem:[%s3 + $0x1a8] sm:$0xff]
      %v485 = vld [vmem:[%s3 + $0x1b0] sm:$0xff]
      %v486 = vld [vmem:[%s3 + $0x1b8] sm:$0xff]
      %v487 = vld [vmem:[%s3 + $0x1c0] sm:$0xff]
      %v488 = vld [vmem:[%s3 + $0x1c8] sm:$0xff]
      %v489 = vld [vmem:[%s3 + $0x1d0] sm:$0xff]
      %v490 = vld [vmem:[%s3 + $0x1d8] sm:$0xff]
      %v491 = vld [vmem:[%s3 + $0x1e0] sm:$0xff]
      %v492 = vld [vmem:[%s3 + $0x1e8] sm:$0xff]
      %v493 = vld [vmem:[%s3 + $0x1f0] sm:$0xff]
      %v494 = vld [vmem:[%s3 + $0x1f8] sm:$0xff]
      %v495 = vld [vmem:[%s6] sm:$0xff]
      %v497 = vperm.slane %v495, 0
      %v498 = vperm.slane %v495, 1
      %v499 = vperm.slane %v495, 2
      %v500 = vperm.slane %v495, 3
      %v501 = vperm.slane %v495, 4
      %v502 = vperm.slane %v495, 5
      %v503 = vperm.slane %v495, 6
      %v504 = vperm.slane %v495, 7
      %v577 = vunpack.c.l.b16 %v431
      %v578 = vunpack.c.h.b16 %v431
      %v579 = vunpack.c.l.b16 %v432
      %v580 = vunpack.c.h.b16 %v432
      %v581 = vunpack.c.l.b16 %v433
      %v582 = vunpack.c.h.b16 %v433
      %v583 = vunpack.c.l.b16 %v434
      %v584 = vunpack.c.h.b16 %v434
      %v585 = vunpack.c.l.b16 %v435
      %v586 = vunpack.c.h.b16 %v435
      %v587 = vunpack.c.l.b16 %v436
      %v588 = vunpack.c.h.b16 %v436
      %v589 = vunpack.c.l.b16 %v437
      %v590 = vunpack.c.h.b16 %v437
      %v591 = vunpack.c.l.b16 %v438
      %v592 = vunpack.c.h.b16 %v438
      %v593 = vunpack.c.l.b16 %v439
      %v594 = vunpack.c.h.b16 %v439
      %v595 = vunpack.c.l.b16 %v440
      %v596 = vunpack.c.h.b16 %v440
      %v597 = vunpack.c.l.b16 %v441
      %v598 = vunpack.c.h.b16 %v441
      %v599 = vunpack.c.l.b16 %v442
      %v600 = vunpack.c.h.b16 %v442
      %v601 = vunpack.c.l.b16 %v443
      %v602 = vunpack.c.h.b16 %v443
      %v603 = vunpack.c.l.b16 %v444
      %v604 = vunpack.c.h.b16 %v444
      %v605 = vunpack.c.l.b16 %v445
      %v606 = vunpack.c.h.b16 %v445
      %v607 = vunpack.c.l.b16 %v446
      %v608 = vunpack.c.h.b16 %v446
      %v609 = vunpack.c.l.b16 %v447
      %v610 = vunpack.c.h.b16 %v447
      %v611 = vunpack.c.l.b16 %v448
      %v612 = vunpack.c.h.b16 %v448
      %v613 = vunpack.c.l.b16 %v449
      %v614 = vunpack.c.h.b16 %v449
      %v615 = vunpack.c.l.b16 %v450
      %v616 = vunpack.c.h.b16 %v450
      %v617 = vunpack.c.l.b16 %v451
      %v618 = vunpack.c.h.b16 %v451
      %v619 = vunpack.c.l.b16 %v452
      %v620 = vunpack.c.h.b16 %v452
      %v621 = vunpack.c.l.b16 %v453
      %v622 = vunpack.c.h.b16 %v453
      %v623 = vunpack.c.l.b16 %v454
      %v624 = vunpack.c.h.b16 %v454
      %v625 = vunpack.c.l.b16 %v455
      %v626 = vunpack.c.h.b16 %v455
      %v627 = vunpack.c.l.b16 %v456
      %v628 = vunpack.c.h.b16 %v456
      %v629 = vunpack.c.l.b16 %v457
      %v630 = vunpack.c.h.b16 %v457
      %v631 = vunpack.c.l.b16 %v458
      %v632 = vunpack.c.h.b16 %v458
      %v633 = vunpack.c.l.b16 %v459
      %v634 = vunpack.c.h.b16 %v459
      %v635 = vunpack.c.l.b16 %v460
      %v636 = vunpack.c.h.b16 %v460
      %v637 = vunpack.c.l.b16 %v461
      %v638 = vunpack.c.h.b16 %v461
      %v639 = vunpack.c.l.b16 %v462
      %v640 = vunpack.c.h.b16 %v462
      %v641 = vunpack.c.l.b16 %v463
      %v642 = vunpack.c.h.b16 %v463
      %v643 = vunpack.c.l.b16 %v464
      %v644 = vunpack.c.h.b16 %v464
      %v645 = vunpack.c.l.b16 %v465
      %v646 = vunpack.c.h.b16 %v465
      %v647 = vunpack.c.l.b16 %v466
      %v648 = vunpack.c.h.b16 %v466
      %v649 = vunpack.c.l.b16 %v467
      %v650 = vunpack.c.h.b16 %v467
      %v651 = vunpack.c.l.b16 %v468
      %v652 = vunpack.c.h.b16 %v468
      %v653 = vunpack.c.l.b16 %v469
      %v654 = vunpack.c.h.b16 %v469
      %v655 = vunpack.c.l.b16 %v470
      %v656 = vunpack.c.h.b16 %v470
      %v657 = vunpack.c.l.b16 %v471
      %v658 = vunpack.c.h.b16 %v471
      %v659 = vunpack.c.l.b16 %v472
      %v660 = vunpack.c.h.b16 %v472
      %v661 = vunpack.c.l.b16 %v473
      %v662 = vunpack.c.h.b16 %v473
      %v663 = vunpack.c.l.b16 %v474
      %v664 = vunpack.c.h.b16 %v474
      %v665 = vunpack.c.l.b16 %v475
      %v666 = vunpack.c.h.b16 %v475
      %v667 = vunpack.c.l.b16 %v476
      %v668 = vunpack.c.h.b16 %v476
      %v669 = vunpack.c.l.b16 %v477
      %v670 = vunpack.c.h.b16 %v477
      %v671 = vunpack.c.l.b16 %v478
      %v672 = vunpack.c.h.b16 %v478
      %v673 = vunpack.c.l.b16 %v479
      %v674 = vunpack.c.h.b16 %v479
      %v675 = vunpack.c.l.b16 %v480
      %v676 = vunpack.c.h.b16 %v480
      %v677 = vunpack.c.l.b16 %v481
      %v678 = vunpack.c.h.b16 %v481
      %v679 = vunpack.c.l.b16 %v482
      %v680 = vunpack.c.h.b16 %v482
      %v681 = vunpack.c.l.b16 %v483
      %v682 = vunpack.c.h.b16 %v483
      %v683 = vunpack.c.l.b16 %v484
      %v684 = vunpack.c.h.b16 %v484
      %v685 = vunpack.c.l.b16 %v485
      %v686 = vunpack.c.h.b16 %v485
      %v687 = vunpack.c.l.b16 %v486
      %v688 = vunpack.c.h.b16 %v486
      %v689 = vunpack.c.l.b16 %v487
      %v690 = vunpack.c.h.b16 %v487
      %v691 = vunpack.c.l.b16 %v488
      %v692 = vunpack.c.h.b16 %v488
      %v693 = vunpack.c.l.b16 %v489
      %v694 = vunpack.c.h.b16 %v489
      %v695 = vunpack.c.l.b16 %v490
      %v696 = vunpack.c.h.b16 %v490
      %v697 = vunpack.c.l.b16 %v491
      %v698 = vunpack.c.h.b16 %v491
      %v699 = vunpack.c.l.b16 %v492
      %v700 = vunpack.c.h.b16 %v492
      %v701 = vunpack.c.l.b16 %v493
      %v702 = vunpack.c.h.b16 %v493
      %v703 = vunpack.c.l.b16 %v494
      %v704 = vunpack.c.h.b16 %v494
      %v705 = vpack.c.b16 %v585, %v577
      %v706 = vpack.c.b16 %v586, %v578
      %v707 = vpack.c.b16 %v587, %v579
      %v708 = vpack.c.b16 %v588, %v580
      %v709 = vpack.c.b16 %v589, %v581
      %v710 = vpack.c.b16 %v590, %v582
      %v711 = vpack.c.b16 %v591, %v583
      %v712 = vpack.c.b16 %v592, %v584
      %v713 = vpack.c.b16 %v601, %v593
      %v714 = vpack.c.b16 %v602, %v594
      %v715 = vpack.c.b16 %v603, %v595
      %v716 = vpack.c.b16 %v604, %v596
      %v717 = vpack.c.b16 %v605, %v597
      %v718 = vpack.c.b16 %v606, %v598
      %v719 = vpack.c.b16 %v607, %v599
      %v720 = vpack.c.b16 %v608, %v600
      %v721 = vpack.c.b16 %v617, %v609
      %v722 = vpack.c.b16 %v618, %v610
      %v723 = vpack.c.b16 %v619, %v611
      %v724 = vpack.c.b16 %v620, %v612
      %v725 = vpack.c.b16 %v621, %v613
      %v726 = vpack.c.b16 %v622, %v614
      %v727 = vpack.c.b16 %v623, %v615
      %v728 = vpack.c.b16 %v624, %v616
      %v729 = vpack.c.b16 %v633, %v625
      %v730 = vpack.c.b16 %v634, %v626
      %v731 = vpack.c.b16 %v635, %v627
      %v732 = vpack.c.b16 %v636, %v628
      %v733 = vpack.c.b16 %v637, %v629
      %v734 = vpack.c.b16 %v638, %v630
      %v735 = vpack.c.b16 %v639, %v631
      %v736 = vpack.c.b16 %v640, %v632
      %v737 = vpack.c.b16 %v649, %v641
      %v738 = vpack.c.b16 %v650, %v642
      %v739 = vpack.c.b16 %v651, %v643
      %v740 = vpack.c.b16 %v652, %v644
      %v741 = vpack.c.b16 %v653, %v645
      %v742 = vpack.c.b16 %v654, %v646
      %v743 = vpack.c.b16 %v655, %v647
      %v744 = vpack.c.b16 %v656, %v648
      %v745 = vpack.c.b16 %v665, %v657
      %v746 = vpack.c.b16 %v666, %v658
      %v747 = vpack.c.b16 %v667, %v659
      %v748 = vpack.c.b16 %v668, %v660
      %v749 = vpack.c.b16 %v669, %v661
      %v750 = vpack.c.b16 %v670, %v662
      %v751 = vpack.c.b16 %v671, %v663
      %v752 = vpack.c.b16 %v672, %v664
      %v753 = vpack.c.b16 %v681, %v673
      %v754 = vpack.c.b16 %v682, %v674
      %v755 = vpack.c.b16 %v683, %v675
      %v756 = vpack.c.b16 %v684, %v676
      %v757 = vpack.c.b16 %v685, %v677
      %v758 = vpack.c.b16 %v686, %v678
      %v759 = vpack.c.b16 %v687, %v679
      %v760 = vpack.c.b16 %v688, %v680
      %v761 = vpack.c.b16 %v697, %v689
      %v762 = vpack.c.b16 %v698, %v690
      %v763 = vpack.c.b16 %v699, %v691
      %v764 = vpack.c.b16 %v700, %v692
      %v765 = vpack.c.b16 %v701, %v693
      %v766 = vpack.c.b16 %v702, %v694
      %v767 = vpack.c.b16 %v703, %v695
      %v768 = vpack.c.b16 %v704, %v696
      %833 = vmatpush.bf16.msra.mxu0 %v761
      %834 = vmatpush.bf16.msra.mxu0 %v753
      %835 = vmatpush.bf16.msra.mxu0 %v745
      %836 = vmatpush.bf16.msra.mxu0 %v737
      %837 = vmatpush.bf16.msra.mxu0 %v729
      %838 = vmatpush.bf16.msra.mxu0 %v721
      %839 = vmatpush.bf16.msra.mxu0 %v713
      %840 = vmatpush.bf16.msra.mxu0 %v705
      %841 = vmatmul.bf16.gmra.mxu0 %v430
      %v842 = vpop.f32.mrf.mxu0
      %v843 = vadd.f32 %v497, %v842
      %v844 = vpop.f32.mrf.mxu0
      %v845 = vadd.f32 %v497, %v844
      %846 = vdwg.mxu0
      %847 = vmatpush.bf16.msra.mxu0 %v762
      %848 = vmatpush.bf16.msra.mxu0 %v754
      %849 = vmatpush.bf16.msra.mxu0 %v746
      %850 = vmatpush.bf16.msra.mxu0 %v738
      %851 = vmatpush.bf16.msra.mxu0 %v730
      %852 = vmatpush.bf16.msra.mxu0 %v722
      %853 = vmatpush.bf16.msra.mxu0 %v714
      %854 = vmatpush.bf16.msra.mxu0 %v706
      %855 = vmatmul.bf16.gmra.mxu0 %v430
      %v856 = vpop.f32.mrf.mxu0
      %v857 = vadd.f32 %v498, %v856
      %v858 = vpop.f32.mrf.mxu0
      %v859 = vadd.f32 %v498, %v858
      %860 = vdwg.mxu0
      %861 = vmatpush.bf16.msra.mxu0 %v763
      %862 = vmatpush.bf16.msra.mxu0 %v755
      %863 = vmatpush.bf16.msra.mxu0 %v747
      %864 = vmatpush.bf16.msra.mxu0 %v739
      %865 = vmatpush.bf16.msra.mxu0 %v731
      %866 = vmatpush.bf16.msra.mxu0 %v723
      %867 = vmatpush.bf16.msra.mxu0 %v715
      %868 = vmatpush.bf16.msra.mxu0 %v707
      %869 = vmatmul.bf16.gmra.mxu0 %v430
      %v870 = vpop.f32.mrf.mxu0
      %v871 = vadd.f32 %v499, %v870
      %v872 = vpop.f32.mrf.mxu0
      %v873 = vadd.f32 %v499, %v872
      %874 = vdwg.mxu0
      %875 = vmatpush.bf16.msra.mxu0 %v764
      %876 = vmatpush.bf16.msra.mxu0 %v756
      %877 = vmatpush.bf16.msra.mxu0 %v748
      %878 = vmatpush.bf16.msra.mxu0 %v740
      %879 = vmatpush.bf16.msra.mxu0 %v732
      %880 = vmatpush.bf16.msra.mxu0 %v724
      %881 = vmatpush.bf16.msra.mxu0 %v716
      %882 = vmatpush.bf16.msra.mxu0 %v708
      %883 = vmatmul.bf16.gmra.mxu0 %v430
      %v884 = vpop.f32.mrf.mxu0
      %v885 = vadd.f32 %v500, %v884
      %v886 = vpop.f32.mrf.mxu0
      %v887 = vadd.f32 %v500, %v886
      %888 = vdwg.mxu0
      %889 = vmatpush.bf16.msra.mxu0 %v765
      %890 = vmatpush.bf16.msra.mxu0 %v757
      %891 = vmatpush.bf16.msra.mxu0 %v749
      %892 = vmatpush.bf16.msra.mxu0 %v741
      %893 = vmatpush.bf16.msra.mxu0 %v733
      %894 = vmatpush.bf16.msra.mxu0 %v725
      %895 = vmatpush.bf16.msra.mxu0 %v717
      %896 = vmatpush.bf16.msra.mxu0 %v709
      %897 = vmatmul.bf16.gmra.mxu0 %v430
      %v898 = vpop.f32.mrf.mxu0
      %v899 = vadd.f32 %v501, %v898
      %v900 = vpop.f32.mrf.mxu0
      %v901 = vadd.f32 %v501, %v900
      %902 = vdwg.mxu0
      %903 = vmatpush.bf16.msra.mxu0 %v766
      %904 = vmatpush.bf16.msra.mxu0 %v758
      %905 = vmatpush.bf16.msra.mxu0 %v750
      %906 = vmatpush.bf16.msra.mxu0 %v742
      %907 = vmatpush.bf16.msra.mxu0 %v734
      %908 = vmatpush.bf16.msra.mxu0 %v726
      %909 = vmatpush.bf16.msra.mxu0 %v718
      %910 = vmatpush.bf16.msra.mxu0 %v710
      %911 = vmatmul.bf16.gmra.mxu0 %v430
      %v912 = vpop.f32.mrf.mxu0
      %v913 = vadd.f32 %v502, %v912
      %v914 = vpop.f32.mrf.mxu0
      %v915 = vadd.f32 %v502, %v914
      %916 = vdwg.mxu0
      %917 = vmatpush.bf16.msra.mxu0 %v767
      %918 = vmatpush.bf16.msra.mxu0 %v759
      %919 = vmatpush.bf16.msra.mxu0 %v751
      %920 = vmatpush.bf16.msra.mxu0 %v743
      %921 = vmatpush.bf16.msra.mxu0 %v735
      %922 = vmatpush.bf16.msra.mxu0 %v727
      %923 = vmatpush.bf16.msra.mxu0 %v719
      %924 = vmatpush.bf16.msra.mxu0 %v711
      %925 = vmatmul.bf16.gmra.mxu0 %v430
      %v926 = vpop.f32.mrf.mxu0
      %v927 = vadd.f32 %v503, %v926
      %v928 = vpop.f32.mrf.mxu0
      %v929 = vadd.f32 %v503, %v928
      %930 = vdwg.mxu0
      %931 = vmatpush.bf16.msra.mxu0 %v768
      %932 = vmatpush.bf16.msra.mxu0 %v760
      %933 = vmatpush.bf16.msra.mxu0 %v752
      %934 = vmatpush.bf16.msra.mxu0 %v744
      %935 = vmatpush.bf16.msra.mxu0 %v736
      %936 = vmatpush.bf16.msra.mxu0 %v728
      %937 = vmatpush.bf16.msra.mxu0 %v720
      %938 = vmatpush.bf16.msra.mxu0 %v712
      %939 = vmatmul.bf16.gmra.mxu0 %v430
      %v940 = vpop.f32.mrf.mxu0
      %v941 = vadd.f32 %v504, %v940
      %v942 = vpop.f32.mrf.mxu0
      %v943 = vadd.f32 %v504, %v942
      %944 = vdwg.mxu0
      %v945 = vmax.f32 %v843, %v845
      %v946 = vrot.slane %v945, 4
      %v947 = vmax.f32 %v945, %v946
      %v948 = vrot.slane %v947, 2
      %v949 = vmax.f32 %v947, %v948
      %v950 = vrot.slane %v949, 1
      %v951 = vmax.f32 %v949, %v950
      %v952 = vmax.f32 %v857, %v859
      %v953 = vrot.slane %v952, 4
      %v954 = vmax.f32 %v952, %v953
      %v955 = vrot.slane %v954, 2
      %v956 = vmax.f32 %v954, %v955
      %v957 = vrot.slane %v956, 1
      %v958 = vmax.f32 %v956, %v957
      %v959 = vmax.f32 %v871, %v873
      %v960 = vrot.slane %v959, 4
      %v961 = vmax.f32 %v959, %v960
      %v962 = vrot.slane %v961, 2
      %v963 = vmax.f32 %v961, %v962
      %v964 = vrot.slane %v963, 1
      %v965 = vmax.f32 %v963, %v964
      %v966 = vmax.f32 %v885, %v887
      %v967 = vrot.slane %v966, 4
      %v968 = vmax.f32 %v966, %v967
      %v969 = vrot.slane %v968, 2
      %v970 = vmax.f32 %v968, %v969
      %v971 = vrot.slane %v970, 1
      %v972 = vmax.f32 %v970, %v971
      %v973 = vmax.f32 %v899, %v901
      %v974 = vrot.slane %v973, 4
      %v975 = vmax.f32 %v973, %v974
      %v976 = vrot.slane %v975, 2
      %v977 = vmax.f32 %v975, %v976
      %v978 = vrot.slane %v977, 1
      %v979 = vmax.f32 %v977, %v978
      %v980 = vmax.f32 %v913, %v915
      %v981 = vrot.slane %v980, 4
      %v982 = vmax.f32 %v980, %v981
      %v983 = vrot.slane %v982, 2
      %v984 = vmax.f32 %v982, %v983
      %v985 = vrot.slane %v984, 1
      %v986 = vmax.f32 %v984, %v985
      %v987 = vmax.f32 %v927, %v929
      %v988 = vrot.slane %v987, 4
      %v989 = vmax.f32 %v987, %v988
      %v990 = vrot.slane %v989, 2
      %v991 = vmax.f32 %v989, %v990
      %v992 = vrot.slane %v991, 1
      %v993 = vmax.f32 %v991, %v992
      %v994 = vmax.f32 %v941, %v943
      %v995 = vrot.slane %v994, 4
      %v996 = vmax.f32 %v994, %v995
      %v997 = vrot.slane %v996, 2
      %v998 = vmax.f32 %v996, %v997
      %v999 = vrot.slane %v998, 1
      %v1000 = vmax.f32 %v998, %v999
      %p1001 = scmp.eq.s32.totalorder %s23, 0
      // Predicated region
      $region49: #{pointnetfeat_forward.3} parent=47 // pred_check
        %p1002 = pneg %p1001
      $region50: #{pointnetfeat_forward.3} parent=47 // pred_check_branch
        %1004 = sbr.rel (%p1002) target = $region52
      $region51: #{pointnetfeat_forward.3} parent=47 // pred_region
        %v1013 = vrot.slane %v958, 7
        %v1014 = vrot.slane %v965, 6
        %v1015 = vrot.slane %v972, 5
        %v1016 = vrot.slane %v979, 4
        %v1017 = vrot.slane %v986, 3
        %v1018 = vrot.slane %v993, 2
        %v1019 = vrot.slane %v1000, 1
        %vm1020 = vcmask 1040384
        %v1021 = vsel %vm1020, %v951, %v1013
        %vm1022 = vcmask 1042434
        %v1023 = vsel %vm1022, %v1014, %v1015
        %vm1024 = vcmask 1041408
        %v1025 = vsel %vm1024, %v1021, %v1023
        %vm1026 = vcmask 1044484
        %v1027 = vsel %vm1026, %v1016, %v1017
        %vm1028 = vcmask 1046534
        %v1029 = vsel %vm1028, %v1018, %v1019
        %vm1030 = vcmask 1045508
        %v1031 = vsel %vm1030, %v1027, %v1029
        %vm1032 = vcmask 1043456
        %v1033 = vsel %vm1032, %v1025, %v1031
        %1035 = vst [vmem:[%s321] sm:$0xff] %v1033
      $region52: #{pointnetfeat_forward.3} parent=47 // pred_fallthru
        _
      %p1036 = scmp.gt.s32.totalorder %s23, 0
      // Predicated region
      $region53: #{pointnetfeat_forward.3} parent=47 // pred_check
        %p1037 = pneg %p1036
      $region54: #{pointnetfeat_forward.3} parent=47 // pred_check_branch
        %1039 = sbr.rel (%p1037) target = $region56
      $region55: #{pointnetfeat_forward.3} parent=47 // pred_region
        %v1040 = vld [vmem:[%s321] sm:$0xff]
        %v1049 = vrot.slane %v958, 7
        %v1050 = vrot.slane %v965, 6
        %v1051 = vrot.slane %v972, 5
        %v1052 = vrot.slane %v979, 4
        %v1053 = vrot.slane %v986, 3
        %v1054 = vrot.slane %v993, 2
        %v1055 = vrot.slane %v1000, 1
        %vm1056 = vcmask 1040384
        %v1057 = vsel %vm1056, %v951, %v1049
        %vm1058 = vcmask 1042434
        %v1059 = vsel %vm1058, %v1050, %v1051
        %vm1060 = vcmask 1041408
        %v1061 = vsel %vm1060, %v1057, %v1059
        %vm1062 = vcmask 1044484
        %v1063 = vsel %vm1062, %v1052, %v1053
        %vm1064 = vcmask 1046534
        %v1065 = vsel %vm1064, %v1054, %v1055
        %vm1066 = vcmask 1045508
        %v1067 = vsel %vm1066, %v1063, %v1065
        %vm1068 = vcmask 1043456
        %v1069 = vsel %vm1068, %v1061, %v1067
        %v1071 = vmax.f32 %v1040, %v1069
        %1072 = vst [vmem:[%s321] sm:$0xff] %v1071
      $region56: #{pointnetfeat_forward.3} parent=47 // pred_fallthru
        _
      %p1073 = scmp.lt.s32.totalorder %s22, 1
      %s1074 = scalar_select %p1073, %s22, 1
      %s1075 = smul.addr %s1074, 8
      %s1076 = scalar_lea.vmem %s7, %s1075
      // Predicated region
      $region57: #{pointnetfeat_forward.3} parent=47 // pred_check
        %p1077 = pneg %p207
      $region58: #{pointnetfeat_forward.3} parent=47 // pred_check_branch
        %1079 = sbr.rel (%p1077) target = $region60
      $region59: #{pointnetfeat_forward.3} parent=47 // pred_region
        _
      $region60: #{pointnetfeat_forward.3} parent=47 // pred_fallthru
        _
    $region48: #{pointnetfeat_forward.3} parent=5 // pred_fallthru
      _
    %p1080 = scmp.le.s32.totalorder 2, %s13
    // Predicated region
    $region61: #{pointnetfeat_forward.3} parent=5 // pred_check
      %p1081 = pneg %p1080
    $region62: #{pointnetfeat_forward.3} parent=5 // pred_check_branch
      %1083 = sbr.rel (%p1081) target = $region64
    $region63: #{pointnetfeat_forward.3} parent=5 // pred_region
      %s1084 = ssub.s32 %s13, 2
      // Predicated region
      $region65: #{pointnetfeat_forward.3} parent=63 // pred_check
        %p1085 = pneg %p213
      $region66: #{pointnetfeat_forward.3} parent=63 // pred_check_branch
        %1087 = sbr.rel (%p1085) target = $region68
      $region67: #{pointnetfeat_forward.3} parent=63 // pred_region
        %p1088 = scmp.lt.s32.totalorder %s24, 1
        %s1089 = scalar_select %p1088, %s24, 1
        %s1090 = smul.addr %s1089, 8
        %s1091 = scalar_lea.vmem %s7, %s1090
      $region68: #{pointnetfeat_forward.3} parent=63 // pred_fallthru
        _
    $region64: #{pointnetfeat_forward.3} parent=5 // pred_fallthru
      _
  $region6: #{pointnetfeat_forward.3} parent=0 // loop_footer
    %s17 = sadd.s32 1, %s13
  $region7: #{pointnetfeat_forward.3} parent=0 // loop_footer_branch
    %12 = sbr.rel target = $region3
  $region8: #{pointnetfeat_forward.3} parent=0 // loop_exit
    _

</llo_original>
